<compile_context>
chip_gen: v6e
topology: v6e:2x2x1
jax: 0.10.0
libtpu: 0.0.40
codegen_flags: <defaults>
</compile_context>

<pallas_src>
import math

import jax
import jax.numpy as jnp
from jax.experimental import pallas as pl
from jax.experimental.pallas import tpu as pltpu


def gru_encoder_kernel(x_ref, wih_ref, whh_ref, bx_ref, bhn_ref,
                       out_ref, hfin_ref, gx_ref):
    """One (batch-tile, time-block) per grid step; full recurrence in-kernel.

    x_ref    : (tt, bb, D)  f32   time-major input block
    wih_ref  : (D, 3H)      bf16  W_ih^T (resident, constant block index)
    whh_ref  : (H, 3H)      bf16  W_hh^T (resident, constant block index)
    bx_ref   : (1, 3H)      f32   folded bias for the hoisted projection
    bhn_ref  : (1, H)       f32   b_hh (n gate only)
    out_ref  : (bb, tt, H)  f32   outputs slab (lane-dense)
    hfin_ref : (bb, H)      f32   carried hidden state (resident over time axis)
    gx_ref   : (tt*bb, 3H)  f32   VMEM scratch for the hoisted projection
    """
    tt, bb, d = x_ref.shape
    h_dim = hfin_ref.shape[-1]
    j = pl.program_id(1)                     # time-block index ("arbitrary")

    # Zero initial hidden state at the first time block of each batch tile
    # (Encoder.init_hidden).  The hidden block index is constant along the
    # time axis, so it stays resident in VMEM and acts as the carry.
    @pl.when(j == 0)
    def _():
        hfin_ref[...] = jnp.zeros_like(hfin_ref)

    # ---- hoisted input projection: one big MXU matmul for all tt steps ----
    # (tt*bb, D) x (D, 3H) in bf16 with f32 accumulation; r/z biases already
    # folded (b_ih + b_hh), n bias is b_ih only.
    x2 = x_ref[...].reshape(tt * bb, d).astype(jnp.bfloat16)
    gx_ref[...] = (
        jnp.dot(x2, wih_ref[...], preferred_element_type=jnp.float32)
        + bx_ref[...]
    )

    whh = whh_ref[...]                                        # (H, 3H) bf16
    bhn = jnp.broadcast_to(bhn_ref[...], (bb, h_dim))         # hoisted broadcast

    h = hfin_ref[...]                                         # (bb, H) f32 carry

    # ---- recurrence over the tt local timesteps (statically unrolled) ----
    for t in range(tt):
        gx_t = gx_ref[t * bb:(t + 1) * bb, :]                 # (bb, 3H) static slice
        gh = jnp.dot(h.astype(jnp.bfloat16), whh,
                     preferred_element_type=jnp.float32)      # (bb, 3H)

        # PyTorch GRU gate order [r | z | n]
        r = jax.nn.sigmoid(gx_t[:, 0:h_dim] + gh[:, 0:h_dim])
        z = jax.nn.sigmoid(gx_t[:, h_dim:2 * h_dim] + gh[:, h_dim:2 * h_dim])
        n = jnp.tanh(gx_t[:, 2 * h_dim:] + r * (gh[:, 2 * h_dim:] + bhn))
        h = (1.0 - z) * n + z * h

        out_ref[:, t, :] = h                                  # static-index store

    hfin_ref[...] = h        # carry to the next time block / final hidden


def encoder_forward(x_btd, w_ih, w_hh, b_ih, b_hh, *, bb=None, tt=None):
    """x_btd: (B, T, D) float32.  Returns (outputs (B,T,H), hidden (B,1,H))."""
    B, T, D = x_btd.shape
    H = w_hh.shape[1]
    G = 3 * H
    bb = B if bb is None else bb
    tt = T if tt is None else tt
    assert B % bb == 0 and T % tt == 0
    assert bb == B or bb % 8 == 0, "batch tile must be sublane-aligned"
    assert tt == T or tt % 8 == 0, "time tile must be sublane-aligned"

    # ---- one-time wrapper glue (plain XLA) ----
    # time-major x so each local timestep is a contiguous (bb, 3H) tile of the
    # hoisted projection; weights pre-transposed for the MXU and cast to bf16.
    x_tbd = jnp.transpose(x_btd, (1, 0, 2)).astype(jnp.float32)   # (T, B, D)
    wih_t = jnp.transpose(w_ih).astype(jnp.bfloat16)              # (D, 3H)
    whh_t = jnp.transpose(w_hh).astype(jnp.bfloat16)              # (H, 3H)
    # fold biases: r/z gates take b_ih + b_hh up front; n gate keeps b_hh
    # separate because it sits under the r* multiply.
    bx = jnp.concatenate([b_ih[:2 * H] + b_hh[:2 * H], b_ih[2 * H:]]
                         ).reshape(1, G).astype(jnp.float32)
    bhn = b_hh[2 * H:].reshape(1, H).astype(jnp.float32)

    grid = (B // bb, T // tt)

    outputs, h_final = pl.pallas_call(
        gru_encoder_kernel,
        out_shape=(jax.ShapeDtypeStruct((B, T, H), jnp.float32),
                   jax.ShapeDtypeStruct((B, H), jnp.float32)),
        grid_spec=pltpu.PrefetchScalarGridSpec(
            num_scalar_prefetch=0,
            grid=grid,
            in_specs=[
                pl.BlockSpec((tt, bb, D), lambda i, j: (j, i, 0)),   # x block
                pl.BlockSpec((D, G), lambda i, j: (0, 0)),           # W_ih^T
                pl.BlockSpec((H, G), lambda i, j: (0, 0)),           # W_hh^T
                pl.BlockSpec((1, G), lambda i, j: (0, 0)),           # folded bias
                pl.BlockSpec((1, H), lambda i, j: (0, 0)),           # b_hh (n)
            ],
            out_specs=[
                pl.BlockSpec((bb, tt, H), lambda i, j: (i, j, 0)),   # outputs slab
                pl.BlockSpec((bb, H), lambda i, j: (i, 0)),          # hidden carry
            ],
            scratch_shapes=[pltpu.VMEM((tt * bb, G), jnp.float32)],  # hoisted gx
        ),
        compiler_params=pltpu.CompilerParams(
            dimension_semantics=("parallel", "arbitrary"),  # batch ∥, time seq
            vmem_limit_bytes=32 * 1024 * 1024,
        ),
    )(x_tbd, wih_t, whh_t, bx, bhn)

    hidden = h_final.reshape(B, 1, H)      # torch.cat(...).unsqueeze(1)
    return outputs, hidden


def encoder_forward_ref(x_btd, w_ih, w_hh, b_ih, b_hh, *, match_bf16=True):
    """Pure-JAX reference GRU.  With match_bf16=True it mirrors the kernel's
    bf16 matmul-operand rounding (f32 accumulate), so only summation order
    differs from the Pallas kernel."""
    B = x_btd.shape[0]
    H = w_hh.shape[1]

    if match_bf16:
        x = x_btd.astype(jnp.bfloat16).astype(jnp.float32)
        wih = w_ih.astype(jnp.bfloat16).astype(jnp.float32)
        whh = w_hh.astype(jnp.bfloat16).astype(jnp.float32)
    else:
        x, wih, whh = x_btd, w_ih, w_hh

    def step(h, xt):
        gx = xt @ wih.T + b_ih
        hh = h.astype(jnp.bfloat16).astype(jnp.float32) if match_bf16 else h
        gh = hh @ whh.T + b_hh
        r = jax.nn.sigmoid(gx[:, :H] + gh[:, :H])
        z = jax.nn.sigmoid(gx[:, H:2 * H] + gh[:, H:2 * H])
        n = jnp.tanh(gx[:, 2 * H:] + r * gh[:, 2 * H:])
        hn = (1.0 - z) * n + z * h
        return hn, hn

    h0 = jnp.zeros((B, H), jnp.float32)
    hT, ys = jax.lax.scan(step, h0, jnp.transpose(x, (1, 0, 2)))
    return jnp.transpose(ys, (1, 0, 2)), hT.reshape(B, 1, H)


if __name__ == "__main__":
    # Small shapes consistent with Encoder(input_size=D, hidden_size=H).
    # H=128 keeps gate slices / output stores lane-aligned; B=8 is sublane-aligned.
    B, T, D, H = 8, 8, 32, 128
    key = jax.random.PRNGKey(0)
    k_x, k_wih, k_whh, k_bih, k_bhh = jax.random.split(key, 5)

    bound = 1.0 / math.sqrt(H)   # PyTorch-style uniform(-1/sqrt(H), 1/sqrt(H))
    x = jax.random.normal(k_x, (B, T, D), jnp.float32)   # float features fed to the GRU
    w_ih = jax.random.uniform(k_wih, (3 * H, D), jnp.float32, -bound, bound)
    w_hh = jax.random.uniform(k_whh, (3 * H, H), jnp.float32, -bound, bound)
    b_ih = jax.random.uniform(k_bih, (3 * H,), jnp.float32, -bound, bound)
    b_hh = jax.random.uniform(k_bhh, (3 * H,), jnp.float32, -bound, bound)

    input_lengths = [T] * B  # accepted but unused, exactly like the PyTorch forward

    outputs, hidden = encoder_forward(x, w_ih, w_hh, b_ih, b_hh)
    jax.block_until_ready((outputs, hidden))

    out_ref, hid_ref = encoder_forward_ref(x, w_ih, w_hh, b_ih, b_hh)
    assert outputs.shape == (B, T, H)
    assert hidden.shape == (B, 1, H)
    assert jnp.allclose(outputs, out_ref, atol=2e-3, rtol=2e-3)
    assert jnp.allclose(hidden, hid_ref, atol=2e-3, rtol=2e-3)

    print("KERNEL_OK")
</pallas_src>

<mosaic_0001>
module attributes {stable_mosaic.version = 11 : i64} {
  func.func @gru_encoder_kernel(%arg0: i32, %arg1: i32, %arg2: memref<8x8x32xf32, #tpu.memory_space<vmem>>, %arg3: memref<32x384xbf16, #tpu.memory_space<vmem>>, %arg4: memref<128x384xbf16, #tpu.memory_space<vmem>>, %arg5: memref<1x384xf32, #tpu.memory_space<vmem>>, %arg6: memref<1x128xf32, #tpu.memory_space<vmem>>, %arg7: memref<8x8x128xf32, #tpu.memory_space<vmem>>, %arg8: memref<8x128xf32, #tpu.memory_space<vmem>>, %arg9: memref<64x384xf32, #tpu.memory_space<vmem>>) attributes {dimension_semantics = [#tpu.dimension_semantics<parallel>, #tpu.dimension_semantics<arbitrary>], iteration_bounds = array<i64: 1, 1>, scalar_prefetch = 0 : i64, scratch_operands = 1 : i64, tpu.core_type = #tpu.core_type<tc>, window_params = [{transform_indices = @transform_0, window_bounds = array<i64: 8, 8, 32>}, {pipeline_mode = #tpu.pipeline_mode<synchronous>, transform_indices = @transform_1, window_bounds = array<i64: 32, 384>}, {pipeline_mode = #tpu.pipeline_mode<synchronous>, transform_indices = @transform_2, window_bounds = array<i64: 128, 384>}, {pipeline_mode = #tpu.pipeline_mode<synchronous>, transform_indices = @transform_3, window_bounds = array<i64: 1, 384>}, {pipeline_mode = #tpu.pipeline_mode<synchronous>, transform_indices = @transform_4, window_bounds = array<i64: 1, 128>}, {transform_indices = @transform_5, window_bounds = array<i64: 8, 8, 128>}, {transform_indices = @transform_6, window_bounds = array<i64: 8, 128>}]} {
    %c0_i32 = arith.constant 0 : i32
    %0 = arith.cmpi eq, %arg1, %c0_i32 : i32
    %1 = arith.extui %0 : i1 to i32
    %c0_i32_0 = arith.constant 0 : i32
    %2 = arith.cmpi ne, %1, %c0_i32_0 : i32
    scf.if %2 {
      %cst_75 = arith.constant 0.000000e+00 : f32
      %282 = vector.broadcast %cst_75 : f32 to vector<8x128xf32>
      %c0_76 = arith.constant 0 : index
      %c0_77 = arith.constant 0 : index
      %283 = vector.load %arg8[%c0_76, %c0_77] : memref<8x128xf32, #tpu.memory_space<vmem>>, vector<8x128xf32>
      tpu.vector_store %arg8[%c0_76, %c0_77], %282 {strides = array<i32>} : memref<8x128xf32, #tpu.memory_space<vmem>>, vector<8x128xf32>,
    } else {
    }
    %c0 = arith.constant 0 : index
    %c0_1 = arith.constant 0 : index
    %c0_2 = arith.constant 0 : index
    %3 = vector.load %arg2[%c0, %c0_1, %c0_2] : memref<8x8x32xf32, #tpu.memory_space<vmem>>, vector<8x8x32xf32>
    %4 = vector.shape_cast %3 : vector<8x8x32xf32> to vector<64x32xf32>
    %5 = arith.truncf %4 : vector<64x32xf32> to vector<64x32xbf16>
    %c0_3 = arith.constant 0 : index
    %c0_4 = arith.constant 0 : index
    %6 = vector.load %arg3[%c0_3, %c0_4] : memref<32x384xbf16, #tpu.memory_space<vmem>>, vector<32x384xbf16>
    %cst = arith.constant dense<0.000000e+00> : vector<64x384xf32>
    %7 = tpu.matmul %5, %6, %cst {dimension_numbers = #tpu.dot_dimension_numbers<[1], [0], [0], [1], [0, 0, 1, 1], [], []>} : vector<64x32xbf16>, vector<32x384xbf16>, vector<64x384xf32> -> vector<64x384xf32>
    %c0_5 = arith.constant 0 : index
    %c0_6 = arith.constant 0 : index
    %8 = vector.load %arg5[%c0_5, %c0_6] : memref<1x384xf32, #tpu.memory_space<vmem>>, vector<1x384xf32>
    %9 = vector.broadcast %8 : vector<1x384xf32> to vector<64x384xf32>
    %10 = arith.addf %7, %9 : vector<64x384xf32>
    %c0_7 = arith.constant 0 : index
    %c0_8 = arith.constant 0 : index
    %11 = vector.load %arg9[%c0_7, %c0_8] : memref<64x384xf32, #tpu.memory_space<vmem>>, vector<64x384xf32>
    tpu.vector_store %arg9[%c0_7, %c0_8], %10 {strides = array<i32>} : memref<64x384xf32, #tpu.memory_space<vmem>>, vector<64x384xf32>,
    %c0_9 = arith.constant 0 : index
    %c0_10 = arith.constant 0 : index
    %12 = vector.load %arg4[%c0_9, %c0_10] : memref<128x384xbf16, #tpu.memory_space<vmem>>, vector<128x384xbf16>
    %c0_11 = arith.constant 0 : index
    %c0_12 = arith.constant 0 : index
    %13 = vector.load %arg6[%c0_11, %c0_12] : memref<1x128xf32, #tpu.memory_space<vmem>>, vector<1x128xf32>
    %14 = vector.shape_cast %13 : vector<1x128xf32> to vector<1x128xf32>
    %15 = vector.broadcast %14 : vector<1x128xf32> to vector<8x128xf32>
    %c0_13 = arith.constant 0 : index
    %c0_14 = arith.constant 0 : index
    %16 = vector.load %arg8[%c0_13, %c0_14] : memref<8x128xf32, #tpu.memory_space<vmem>>, vector<8x128xf32>
    %c0_15 = arith.constant 0 : index
    %c0_16 = arith.constant 0 : index
    %17 = vector.load %arg9[%c0_15, %c0_16] : memref<64x384xf32, #tpu.memory_space<vmem>>, vector<8x384xf32>
    %18 = arith.truncf %16 : vector<8x128xf32> to vector<8x128xbf16>
    %cst_17 = arith.constant dense<0.000000e+00> : vector<8x384xf32>
    %19 = tpu.matmul %18, %12, %cst_17 {dimension_numbers = #tpu.dot_dimension_numbers<[1], [0], [0], [1], [0, 0, 1, 1], [], []>} : vector<8x128xbf16>, vector<128x384xbf16>, vector<8x384xf32> -> vector<8x384xf32>
    %20 = vector.extract_strided_slice %17 {offsets = [0, 0], sizes = [8, 128], strides = [1, 1]} : vector<8x384xf32> to vector<8x128xf32>
    %21 = vector.extract_strided_slice %19 {offsets = [0, 0], sizes = [8, 128], strides = [1, 1]} : vector<8x384xf32> to vector<8x128xf32>
    %22 = arith.addf %20, %21 : vector<8x128xf32>
    %23 = arith.negf %22 : vector<8x128xf32>
    %24 = math.exp %23 : vector<8x128xf32>
    %cst_18 = arith.constant 1.000000e+00 : f32
    %25 = vector.broadcast %cst_18 : f32 to vector<8x128xf32>
    %26 = arith.addf %25, %24 : vector<8x128xf32>
    %27 = arith.divf %25, %26 : vector<8x128xf32>
    %28 = vector.extract_strided_slice %17 {offsets = [0, 128], sizes = [8, 128], strides = [1, 1]} : vector<8x384xf32> to vector<8x128xf32>
    %29 = vector.extract_strided_slice %19 {offsets = [0, 128], sizes = [8, 128], strides = [1, 1]} : vector<8x384xf32> to vector<8x128xf32>
    %30 = arith.addf %28, %29 : vector<8x128xf32>
    %31 = arith.negf %30 : vector<8x128xf32>
    %32 = math.exp %31 : vector<8x128xf32>
    %cst_19 = arith.constant 1.000000e+00 : f32
    %33 = vector.broadcast %cst_19 : f32 to vector<8x128xf32>
    %34 = arith.addf %33, %32 : vector<8x128xf32>
    %35 = arith.divf %33, %34 : vector<8x128xf32>
    %36 = vector.extract_strided_slice %17 {offsets = [0, 256], sizes = [8, 128], strides = [1, 1]} : vector<8x384xf32> to vector<8x128xf32>
    %37 = vector.extract_strided_slice %19 {offsets = [0, 256], sizes = [8, 128], strides = [1, 1]} : vector<8x384xf32> to vector<8x128xf32>
    %38 = arith.addf %37, %15 : vector<8x128xf32>
    %39 = arith.mulf %27, %38 : vector<8x128xf32>
    %40 = arith.addf %36, %39 : vector<8x128xf32>
    %41 = math.tanh %40 : vector<8x128xf32>
    %cst_20 = arith.constant 1.000000e+00 : f32
    %42 = vector.broadcast %cst_20 : f32 to vector<8x128xf32>
    %43 = arith.subf %42, %35 : vector<8x128xf32>
    %44 = arith.mulf %43, %41 : vector<8x128xf32>
    %45 = arith.mulf %35, %16 : vector<8x128xf32>
    %46 = arith.addf %44, %45 : vector<8x128xf32>
    %c0_21 = arith.constant 0 : index
    %c0_22 = arith.constant 0 : index
    %c0_23 = arith.constant 0 : index
    %47 = vector.load %arg7[%c0_21, %c0_22, %c0_23] : memref<8x8x128xf32, #tpu.memory_space<vmem>>, vector<8x1x128xf32>
    %48 = vector.shape_cast %47 : vector<8x1x128xf32> to vector<8x128xf32>
    %49 = vector.shape_cast %46 : vector<8x128xf32> to vector<8x1x128xf32>
    tpu.vector_store %arg7[%c0_21, %c0_22, %c0_23], %49 {strides = array<i32>} : memref<8x8x128xf32, #tpu.memory_space<vmem>>, vector<8x1x128xf32>,
    %c8 = arith.constant 8 : index
    %c0_24 = arith.constant 0 : index
    %50 = vector.load %arg9[%c8, %c0_24] : memref<64x384xf32, #tpu.memory_space<vmem>>, vector<8x384xf32>
    %51 = arith.truncf %46 : vector<8x128xf32> to vector<8x128xbf16>
    %cst_25 = arith.constant dense<0.000000e+00> : vector<8x384xf32>
    %52 = tpu.matmul %51, %12, %cst_25 {dimension_numbers = #tpu.dot_dimension_numbers<[1], [0], [0], [1], [0, 0, 1, 1], [], []>} : vector<8x128xbf16>, vector<128x384xbf16>, vector<8x384xf32> -> vector<8x384xf32>
    %53 = vector.extract_strided_slice %50 {offsets = [0, 0], sizes = [8, 128], strides = [1, 1]} : vector<8x384xf32> to vector<8x128xf32>
    %54 = vector.extract_strided_slice %52 {offsets = [0, 0], sizes = [8, 128], strides = [1, 1]} : vector<8x384xf32> to vector<8x128xf32>
    %55 = arith.addf %53, %54 : vector<8x128xf32>
    %56 = arith.negf %55 : vector<8x128xf32>
    %57 = math.exp %56 : vector<8x128xf32>
    %cst_26 = arith.constant 1.000000e+00 : f32
    %58 = vector.broadcast %cst_26 : f32 to vector<8x128xf32>
    %59 = arith.addf %58, %57 : vector<8x128xf32>
    %60 = arith.divf %58, %59 : vector<8x128xf32>
    %61 = vector.extract_strided_slice %50 {offsets = [0, 128], sizes = [8, 128], strides = [1, 1]} : vector<8x384xf32> to vector<8x128xf32>
    %62 = vector.extract_strided_slice %52 {offsets = [0, 128], sizes = [8, 128], strides = [1, 1]} : vector<8x384xf32> to vector<8x128xf32>
    %63 = arith.addf %61, %62 : vector<8x128xf32>
    %64 = arith.negf %63 : vector<8x128xf32>
    %65 = math.exp %64 : vector<8x128xf32>
    %cst_27 = arith.constant 1.000000e+00 : f32
    %66 = vector.broadcast %cst_27 : f32 to vector<8x128xf32>
    %67 = arith.addf %66, %65 : vector<8x128xf32>
    %68 = arith.divf %66, %67 : vector<8x128xf32>
    %69 = vector.extract_strided_slice %50 {offsets = [0, 256], sizes = [8, 128], strides = [1, 1]} : vector<8x384xf32> to vector<8x128xf32>
    %70 = vector.extract_strided_slice %52 {offsets = [0, 256], sizes = [8, 128], strides = [1, 1]} : vector<8x384xf32> to vector<8x128xf32>
    %71 = arith.addf %70, %15 : vector<8x128xf32>
    %72 = arith.mulf %60, %71 : vector<8x128xf32>
    %73 = arith.addf %69, %72 : vector<8x128xf32>
    %74 = math.tanh %73 : vector<8x128xf32>
    %cst_28 = arith.constant 1.000000e+00 : f32
    %75 = vector.broadcast %cst_28 : f32 to vector<8x128xf32>
    %76 = arith.subf %75, %68 : vector<8x128xf32>
    %77 = arith.mulf %76, %74 : vector<8x128xf32>
    %78 = arith.mulf %68, %46 : vector<8x128xf32>
    %79 = arith.addf %77, %78 : vector<8x128xf32>
    %c0_29 = arith.constant 0 : index
    %c1 = arith.constant 1 : index
    %c0_30 = arith.constant 0 : index
    %80 = vector.load %arg7[%c0_29, %c1, %c0_30] : memref<8x8x128xf32, #tpu.memory_space<vmem>>, vector<8x1x128xf32>
    %81 = vector.shape_cast %80 : vector<8x1x128xf32> to vector<8x128xf32>
    %82 = vector.shape_cast %79 : vector<8x128xf32> to vector<8x1x128xf32>
    tpu.vector_store %arg7[%c0_29, %c1, %c0_30], %82 {strides = array<i32>} : memref<8x8x128xf32, #tpu.memory_space<vmem>>, vector<8x1x128xf32>,
    %c16 = arith.constant 16 : index
    %c0_31 = arith.constant 0 : index
    %83 = vector.load %arg9[%c16, %c0_31] : memref<64x384xf32, #tpu.memory_space<vmem>>, vector<8x384xf32>
    %84 = arith.truncf %79 : vector<8x128xf32> to vector<8x128xbf16>
    %cst_32 = arith.constant dense<0.000000e+00> : vector<8x384xf32>
    %85 = tpu.matmul %84, %12, %cst_32 {dimension_numbers = #tpu.dot_dimension_numbers<[1], [0], [0], [1], [0, 0, 1, 1], [], []>} : vector<8x128xbf16>, vector<128x384xbf16>, vector<8x384xf32> -> vector<8x384xf32>
    %86 = vector.extract_strided_slice %83 {offsets = [0, 0], sizes = [8, 128], strides = [1, 1]} : vector<8x384xf32> to vector<8x128xf32>
    %87 = vector.extract_strided_slice %85 {offsets = [0, 0], sizes = [8, 128], strides = [1, 1]} : vector<8x384xf32> to vector<8x128xf32>
    %88 = arith.addf %86, %87 : vector<8x128xf32>
    %89 = arith.negf %88 : vector<8x128xf32>
    %90 = math.exp %89 : vector<8x128xf32>
    %cst_33 = arith.constant 1.000000e+00 : f32
    %91 = vector.broadcast %cst_33 : f32 to vector<8x128xf32>
    %92 = arith.addf %91, %90 : vector<8x128xf32>
    %93 = arith.divf %91, %92 : vector<8x128xf32>
    %94 = vector.extract_strided_slice %83 {offsets = [0, 128], sizes = [8, 128], strides = [1, 1]} : vector<8x384xf32> to vector<8x128xf32>
    %95 = vector.extract_strided_slice %85 {offsets = [0, 128], sizes = [8, 128], strides = [1, 1]} : vector<8x384xf32> to vector<8x128xf32>
    %96 = arith.addf %94, %95 : vector<8x128xf32>
    %97 = arith.negf %96 : vector<8x128xf32>
    %98 = math.exp %97 : vector<8x128xf32>
    %cst_34 = arith.constant 1.000000e+00 : f32
    %99 = vector.broadcast %cst_34 : f32 to vector<8x128xf32>
    %100 = arith.addf %99, %98 : vector<8x128xf32>
    %101 = arith.divf %99, %100 : vector<8x128xf32>
    %102 = vector.extract_strided_slice %83 {offsets = [0, 256], sizes = [8, 128], strides = [1, 1]} : vector<8x384xf32> to vector<8x128xf32>
    %103 = vector.extract_strided_slice %85 {offsets = [0, 256], sizes = [8, 128], strides = [1, 1]} : vector<8x384xf32> to vector<8x128xf32>
    %104 = arith.addf %103, %15 : vector<8x128xf32>
    %105 = arith.mulf %93, %104 : vector<8x128xf32>
    %106 = arith.addf %102, %105 : vector<8x128xf32>
    %107 = math.tanh %106 : vector<8x128xf32>
    %cst_35 = arith.constant 1.000000e+00 : f32
    %108 = vector.broadcast %cst_35 : f32 to vector<8x128xf32>
    %109 = arith.subf %108, %101 : vector<8x128xf32>
    %110 = arith.mulf %109, %107 : vector<8x128xf32>
    %111 = arith.mulf %101, %79 : vector<8x128xf32>
    %112 = arith.addf %110, %111 : vector<8x128xf32>
    %c0_36 = arith.constant 0 : index
    %c2 = arith.constant 2 : index
    %c0_37 = arith.constant 0 : index
    %113 = vector.load %arg7[%c0_36, %c2, %c0_37] : memref<8x8x128xf32, #tpu.memory_space<vmem>>, vector<8x1x128xf32>
    %114 = vector.shape_cast %113 : vector<8x1x128xf32> to vector<8x128xf32>
    %115 = vector.shape_cast %112 : vector<8x128xf32> to vector<8x1x128xf32>
    tpu.vector_store %arg7[%c0_36, %c2, %c0_37], %115 {strides = array<i32>} : memref<8x8x128xf32, #tpu.memory_space<vmem>>, vector<8x1x128xf32>,
    %c24 = arith.constant 24 : index
    %c0_38 = arith.constant 0 : index
    %116 = vector.load %arg9[%c24, %c0_38] : memref<64x384xf32, #tpu.memory_space<vmem>>, vector<8x384xf32>
    %117 = arith.truncf %112 : vector<8x128xf32> to vector<8x128xbf16>
    %cst_39 = arith.constant dense<0.000000e+00> : vector<8x384xf32>
    %118 = tpu.matmul %117, %12, %cst_39 {dimension_numbers = #tpu.dot_dimension_numbers<[1], [0], [0], [1], [0, 0, 1, 1], [], []>} : vector<8x128xbf16>, vector<128x384xbf16>, vector<8x384xf32> -> vector<8x384xf32>
    %119 = vector.extract_strided_slice %116 {offsets = [0, 0], sizes = [8, 128], strides = [1, 1]} : vector<8x384xf32> to vector<8x128xf32>
    %120 = vector.extract_strided_slice %118 {offsets = [0, 0], sizes = [8, 128], strides = [1, 1]} : vector<8x384xf32> to vector<8x128xf32>
    %121 = arith.addf %119, %120 : vector<8x128xf32>
    %122 = arith.negf %121 : vector<8x128xf32>
    %123 = math.exp %122 : vector<8x128xf32>
    %cst_40 = arith.constant 1.000000e+00 : f32
    %124 = vector.broadcast %cst_40 : f32 to vector<8x128xf32>
    %125 = arith.addf %124, %123 : vector<8x128xf32>
    %126 = arith.divf %124, %125 : vector<8x128xf32>
    %127 = vector.extract_strided_slice %116 {offsets = [0, 128], sizes = [8, 128], strides = [1, 1]} : vector<8x384xf32> to vector<8x128xf32>
    %128 = vector.extract_strided_slice %118 {offsets = [0, 128], sizes = [8, 128], strides = [1, 1]} : vector<8x384xf32> to vector<8x128xf32>
    %129 = arith.addf %127, %128 : vector<8x128xf32>
    %130 = arith.negf %129 : vector<8x128xf32>
    %131 = math.exp %130 : vector<8x128xf32>
    %cst_41 = arith.constant 1.000000e+00 : f32
    %132 = vector.broadcast %cst_41 : f32 to vector<8x128xf32>
    %133 = arith.addf %132, %131 : vector<8x128xf32>
    %134 = arith.divf %132, %133 : vector<8x128xf32>
    %135 = vector.extract_strided_slice %116 {offsets = [0, 256], sizes = [8, 128], strides = [1, 1]} : vector<8x384xf32> to vector<8x128xf32>
    %136 = vector.extract_strided_slice %118 {offsets = [0, 256], sizes = [8, 128], strides = [1, 1]} : vector<8x384xf32> to vector<8x128xf32>
    %137 = arith.addf %136, %15 : vector<8x128xf32>
    %138 = arith.mulf %126, %137 : vector<8x128xf32>
    %139 = arith.addf %135, %138 : vector<8x128xf32>
    %140 = math.tanh %139 : vector<8x128xf32>
    %cst_42 = arith.constant 1.000000e+00 : f32
    %141 = vector.broadcast %cst_42 : f32 to vector<8x128xf32>
    %142 = arith.subf %141, %134 : vector<8x128xf32>
    %143 = arith.mulf %142, %140 : vector<8x128xf32>
    %144 = arith.mulf %134, %112 : vector<8x128xf32>
    %145 = arith.addf %143, %144 : vector<8x128xf32>
    %c0_43 = arith.constant 0 : index
    %c3 = arith.constant 3 : index
    %c0_44 = arith.constant 0 : index
    %146 = vector.load %arg7[%c0_43, %c3, %c0_44] : memref<8x8x128xf32, #tpu.memory_space<vmem>>, vector<8x1x128xf32>
    %147 = vector.shape_cast %146 : vector<8x1x128xf32> to vector<8x128xf32>
    %148 = vector.shape_cast %145 : vector<8x128xf32> to vector<8x1x128xf32>
    tpu.vector_store %arg7[%c0_43, %c3, %c0_44], %148 {strides = array<i32>} : memref<8x8x128xf32, #tpu.memory_space<vmem>>, vector<8x1x128xf32>,
    %c32 = arith.constant 32 : index
    %c0_45 = arith.constant 0 : index
    %149 = vector.load %arg9[%c32, %c0_45] : memref<64x384xf32, #tpu.memory_space<vmem>>, vector<8x384xf32>
    %150 = arith.truncf %145 : vector<8x128xf32> to vector<8x128xbf16>
    %cst_46 = arith.constant dense<0.000000e+00> : vector<8x384xf32>
    %151 = tpu.matmul %150, %12, %cst_46 {dimension_numbers = #tpu.dot_dimension_numbers<[1], [0], [0], [1], [0, 0, 1, 1], [], []>} : vector<8x128xbf16>, vector<128x384xbf16>, vector<8x384xf32> -> vector<8x384xf32>
    %152 = vector.extract_strided_slice %149 {offsets = [0, 0], sizes = [8, 128], strides = [1, 1]} : vector<8x384xf32> to vector<8x128xf32>
    %153 = vector.extract_strided_slice %151 {offsets = [0, 0], sizes = [8, 128], strides = [1, 1]} : vector<8x384xf32> to vector<8x128xf32>
    %154 = arith.addf %152, %153 : vector<8x128xf32>
    %155 = arith.negf %154 : vector<8x128xf32>
    %156 = math.exp %155 : vector<8x128xf32>
    %cst_47 = arith.constant 1.000000e+00 : f32
    %157 = vector.broadcast %cst_47 : f32 to vector<8x128xf32>
    %158 = arith.addf %157, %156 : vector<8x128xf32>
    %159 = arith.divf %157, %158 : vector<8x128xf32>
    %160 = vector.extract_strided_slice %149 {offsets = [0, 128], sizes = [8, 128], strides = [1, 1]} : vector<8x384xf32> to vector<8x128xf32>
    %161 = vector.extract_strided_slice %151 {offsets = [0, 128], sizes = [8, 128], strides = [1, 1]} : vector<8x384xf32> to vector<8x128xf32>
    %162 = arith.addf %160, %161 : vector<8x128xf32>
    %163 = arith.negf %162 : vector<8x128xf32>
    %164 = math.exp %163 : vector<8x128xf32>
    %cst_48 = arith.constant 1.000000e+00 : f32
    %165 = vector.broadcast %cst_48 : f32 to vector<8x128xf32>
    %166 = arith.addf %165, %164 : vector<8x128xf32>
    %167 = arith.divf %165, %166 : vector<8x128xf32>
    %168 = vector.extract_strided_slice %149 {offsets = [0, 256], sizes = [8, 128], strides = [1, 1]} : vector<8x384xf32> to vector<8x128xf32>
    %169 = vector.extract_strided_slice %151 {offsets = [0, 256], sizes = [8, 128], strides = [1, 1]} : vector<8x384xf32> to vector<8x128xf32>
    %170 = arith.addf %169, %15 : vector<8x128xf32>
    %171 = arith.mulf %159, %170 : vector<8x128xf32>
    %172 = arith.addf %168, %171 : vector<8x128xf32>
    %173 = math.tanh %172 : vector<8x128xf32>
    %cst_49 = arith.constant 1.000000e+00 : f32
    %174 = vector.broadcast %cst_49 : f32 to vector<8x128xf32>
    %175 = arith.subf %174, %167 : vector<8x128xf32>
    %176 = arith.mulf %175, %173 : vector<8x128xf32>
    %177 = arith.mulf %167, %145 : vector<8x128xf32>
    %178 = arith.addf %176, %177 : vector<8x128xf32>
    %c0_50 = arith.constant 0 : index
    %c4 = arith.constant 4 : index
    %c0_51 = arith.constant 0 : index
    %179 = vector.load %arg7[%c0_50, %c4, %c0_51] : memref<8x8x128xf32, #tpu.memory_space<vmem>>, vector<8x1x128xf32>
    %180 = vector.shape_cast %179 : vector<8x1x128xf32> to vector<8x128xf32>
    %181 = vector.shape_cast %178 : vector<8x128xf32> to vector<8x1x128xf32>
    tpu.vector_store %arg7[%c0_50, %c4, %c0_51], %181 {strides = array<i32>} : memref<8x8x128xf32, #tpu.memory_space<vmem>>, vector<8x1x128xf32>,
    %c40 = arith.constant 40 : index
    %c0_52 = arith.constant 0 : index
    %182 = vector.load %arg9[%c40, %c0_52] : memref<64x384xf32, #tpu.memory_space<vmem>>, vector<8x384xf32>
    %183 = arith.truncf %178 : vector<8x128xf32> to vector<8x128xbf16>
    %cst_53 = arith.constant dense<0.000000e+00> : vector<8x384xf32>
    %184 = tpu.matmul %183, %12, %cst_53 {dimension_numbers = #tpu.dot_dimension_numbers<[1], [0], [0], [1], [0, 0, 1, 1], [], []>} : vector<8x128xbf16>, vector<128x384xbf16>, vector<8x384xf32> -> vector<8x384xf32>
    %185 = vector.extract_strided_slice %182 {offsets = [0, 0], sizes = [8, 128], strides = [1, 1]} : vector<8x384xf32> to vector<8x128xf32>
    %186 = vector.extract_strided_slice %184 {offsets = [0, 0], sizes = [8, 128], strides = [1, 1]} : vector<8x384xf32> to vector<8x128xf32>
    %187 = arith.addf %185, %186 : vector<8x128xf32>
    %188 = arith.negf %187 : vector<8x128xf32>
    %189 = math.exp %188 : vector<8x128xf32>
    %cst_54 = arith.constant 1.000000e+00 : f32
    %190 = vector.broadcast %cst_54 : f32 to vector<8x128xf32>
    %191 = arith.addf %190, %189 : vector<8x128xf32>
    %192 = arith.divf %190, %191 : vector<8x128xf32>
    %193 = vector.extract_strided_slice %182 {offsets = [0, 128], sizes = [8, 128], strides = [1, 1]} : vector<8x384xf32> to vector<8x128xf32>
    %194 = vector.extract_strided_slice %184 {offsets = [0, 128], sizes = [8, 128], strides = [1, 1]} : vector<8x384xf32> to vector<8x128xf32>
    %195 = arith.addf %193, %194 : vector<8x128xf32>
    %196 = arith.negf %195 : vector<8x128xf32>
    %197 = math.exp %196 : vector<8x128xf32>
    %cst_55 = arith.constant 1.000000e+00 : f32
    %198 = vector.broadcast %cst_55 : f32 to vector<8x128xf32>
    %199 = arith.addf %198, %197 : vector<8x128xf32>
    %200 = arith.divf %198, %199 : vector<8x128xf32>
    %201 = vector.extract_strided_slice %182 {offsets = [0, 256], sizes = [8, 128], strides = [1, 1]} : vector<8x384xf32> to vector<8x128xf32>
    %202 = vector.extract_strided_slice %184 {offsets = [0, 256], sizes = [8, 128], strides = [1, 1]} : vector<8x384xf32> to vector<8x128xf32>
    %203 = arith.addf %202, %15 : vector<8x128xf32>
    %204 = arith.mulf %192, %203 : vector<8x128xf32>
    %205 = arith.addf %201, %204 : vector<8x128xf32>
    %206 = math.tanh %205 : vector<8x128xf32>
    %cst_56 = arith.constant 1.000000e+00 : f32
    %207 = vector.broadcast %cst_56 : f32 to vector<8x128xf32>
    %208 = arith.subf %207, %200 : vector<8x128xf32>
    %209 = arith.mulf %208, %206 : vector<8x128xf32>
    %210 = arith.mulf %200, %178 : vector<8x128xf32>
    %211 = arith.addf %209, %210 : vector<8x128xf32>
    %c0_57 = arith.constant 0 : index
    %c5 = arith.constant 5 : index
    %c0_58 = arith.constant 0 : index
    %212 = vector.load %arg7[%c0_57, %c5, %c0_58] : memref<8x8x128xf32, #tpu.memory_space<vmem>>, vector<8x1x128xf32>
    %213 = vector.shape_cast %212 : vector<8x1x128xf32> to vector<8x128xf32>
    %214 = vector.shape_cast %211 : vector<8x128xf32> to vector<8x1x128xf32>
    tpu.vector_store %arg7[%c0_57, %c5, %c0_58], %214 {strides = array<i32>} : memref<8x8x128xf32, #tpu.memory_space<vmem>>, vector<8x1x128xf32>,
    %c48 = arith.constant 48 : index
    %c0_59 = arith.constant 0 : index
    %215 = vector.load %arg9[%c48, %c0_59] : memref<64x384xf32, #tpu.memory_space<vmem>>, vector<8x384xf32>
    %216 = arith.truncf %211 : vector<8x128xf32> to vector<8x128xbf16>
    %cst_60 = arith.constant dense<0.000000e+00> : vector<8x384xf32>
    %217 = tpu.matmul %216, %12, %cst_60 {dimension_numbers = #tpu.dot_dimension_numbers<[1], [0], [0], [1], [0, 0, 1, 1], [], []>} : vector<8x128xbf16>, vector<128x384xbf16>, vector<8x384xf32> -> vector<8x384xf32>
    %218 = vector.extract_strided_slice %215 {offsets = [0, 0], sizes = [8, 128], strides = [1, 1]} : vector<8x384xf32> to vector<8x128xf32>
    %219 = vector.extract_strided_slice %217 {offsets = [0, 0], sizes = [8, 128], strides = [1, 1]} : vector<8x384xf32> to vector<8x128xf32>
    %220 = arith.addf %218, %219 : vector<8x128xf32>
    %221 = arith.negf %220 : vector<8x128xf32>
    %222 = math.exp %221 : vector<8x128xf32>
    %cst_61 = arith.constant 1.000000e+00 : f32
    %223 = vector.broadcast %cst_61 : f32 to vector<8x128xf32>
    %224 = arith.addf %223, %222 : vector<8x128xf32>
    %225 = arith.divf %223, %224 : vector<8x128xf32>
    %226 = vector.extract_strided_slice %215 {offsets = [0, 128], sizes = [8, 128], strides = [1, 1]} : vector<8x384xf32> to vector<8x128xf32>
    %227 = vector.extract_strided_slice %217 {offsets = [0, 128], sizes = [8, 128], strides = [1, 1]} : vector<8x384xf32> to vector<8x128xf32>
    %228 = arith.addf %226, %227 : vector<8x128xf32>
    %229 = arith.negf %228 : vector<8x128xf32>
    %230 = math.exp %229 : vector<8x128xf32>
    %cst_62 = arith.constant 1.000000e+00 : f32
    %231 = vector.broadcast %cst_62 : f32 to vector<8x128xf32>
    %232 = arith.addf %231, %230 : vector<8x128xf32>
    %233 = arith.divf %231, %232 : vector<8x128xf32>
    %234 = vector.extract_strided_slice %215 {offsets = [0, 256], sizes = [8, 128], strides = [1, 1]} : vector<8x384xf32> to vector<8x128xf32>
    %235 = vector.extract_strided_slice %217 {offsets = [0, 256], sizes = [8, 128], strides = [1, 1]} : vector<8x384xf32> to vector<8x128xf32>
    %236 = arith.addf %235, %15 : vector<8x128xf32>
    %237 = arith.mulf %225, %236 : vector<8x128xf32>
    %238 = arith.addf %234, %237 : vector<8x128xf32>
    %239 = math.tanh %238 : vector<8x128xf32>
    %cst_63 = arith.constant 1.000000e+00 : f32
    %240 = vector.broadcast %cst_63 : f32 to vector<8x128xf32>
    %241 = arith.subf %240, %233 : vector<8x128xf32>
    %242 = arith.mulf %241, %239 : vector<8x128xf32>
    %243 = arith.mulf %233, %211 : vector<8x128xf32>
    %244 = arith.addf %242, %243 : vector<8x128xf32>
    %c0_64 = arith.constant 0 : index
    %c6 = arith.constant 6 : index
    %c0_65 = arith.constant 0 : index
    %245 = vector.load %arg7[%c0_64, %c6, %c0_65] : memref<8x8x128xf32, #tpu.memory_space<vmem>>, vector<8x1x128xf32>
    %246 = vector.shape_cast %245 : vector<8x1x128xf32> to vector<8x128xf32>
    %247 = vector.shape_cast %244 : vector<8x128xf32> to vector<8x1x128xf32>
    tpu.vector_store %arg7[%c0_64, %c6, %c0_65], %247 {strides = array<i32>} : memref<8x8x128xf32, #tpu.memory_space<vmem>>, vector<8x1x128xf32>,
    %c56 = arith.constant 56 : index
    %c0_66 = arith.constant 0 : index
    %248 = vector.load %arg9[%c56, %c0_66] : memref<64x384xf32, #tpu.memory_space<vmem>>, vector<8x384xf32>
    %249 = arith.truncf %244 : vector<8x128xf32> to vector<8x128xbf16>
    %cst_67 = arith.constant dense<0.000000e+00> : vector<8x384xf32>
    %250 = tpu.matmul %249, %12, %cst_67 {dimension_numbers = #tpu.dot_dimension_numbers<[1], [0], [0], [1], [0, 0, 1, 1], [], []>} : vector<8x128xbf16>, vector<128x384xbf16>, vector<8x384xf32> -> vector<8x384xf32>
    %251 = vector.extract_strided_slice %248 {offsets = [0, 0], sizes = [8, 128], strides = [1, 1]} : vector<8x384xf32> to vector<8x128xf32>
    %252 = vector.extract_strided_slice %250 {offsets = [0, 0], sizes = [8, 128], strides = [1, 1]} : vector<8x384xf32> to vector<8x128xf32>
    %253 = arith.addf %251, %252 : vector<8x128xf32>
    %254 = arith.negf %253 : vector<8x128xf32>
    %255 = math.exp %254 : vector<8x128xf32>
    %cst_68 = arith.constant 1.000000e+00 : f32
    %256 = vector.broadcast %cst_68 : f32 to vector<8x128xf32>
    %257 = arith.addf %256, %255 : vector<8x128xf32>
    %258 = arith.divf %256, %257 : vector<8x128xf32>
    %259 = vector.extract_strided_slice %248 {offsets = [0, 128], sizes = [8, 128], strides = [1, 1]} : vector<8x384xf32> to vector<8x128xf32>
    %260 = vector.extract_strided_slice %250 {offsets = [0, 128], sizes = [8, 128], strides = [1, 1]} : vector<8x384xf32> to vector<8x128xf32>
    %261 = arith.addf %259, %260 : vector<8x128xf32>
    %262 = arith.negf %261 : vector<8x128xf32>
    %263 = math.exp %262 : vector<8x128xf32>
    %cst_69 = arith.constant 1.000000e+00 : f32
    %264 = vector.broadcast %cst_69 : f32 to vector<8x128xf32>
    %265 = arith.addf %264, %263 : vector<8x128xf32>
    %266 = arith.divf %264, %265 : vector<8x128xf32>
    %267 = vector.extract_strided_slice %248 {offsets = [0, 256], sizes = [8, 128], strides = [1, 1]} : vector<8x384xf32> to vector<8x128xf32>
    %268 = vector.extract_strided_slice %250 {offsets = [0, 256], sizes = [8, 128], strides = [1, 1]} : vector<8x384xf32> to vector<8x128xf32>
    %269 = arith.addf %268, %15 : vector<8x128xf32>
    %270 = arith.mulf %258, %269 : vector<8x128xf32>
    %271 = arith.addf %267, %270 : vector<8x128xf32>
    %272 = math.tanh %271 : vector<8x128xf32>
    %cst_70 = arith.constant 1.000000e+00 : f32
    %273 = vector.broadcast %cst_70 : f32 to vector<8x128xf32>
    %274 = arith.subf %273, %266 : vector<8x128xf32>
    %275 = arith.mulf %274, %272 : vector<8x128xf32>
    %276 = arith.mulf %266, %244 : vector<8x128xf32>
    %277 = arith.addf %275, %276 : vector<8x128xf32>
    %c0_71 = arith.constant 0 : index
    %c7 = arith.constant 7 : index
    %c0_72 = arith.constant 0 : index
    %278 = vector.load %arg7[%c0_71, %c7, %c0_72] : memref<8x8x128xf32, #tpu.memory_space<vmem>>, vector<8x1x128xf32>
    %279 = vector.shape_cast %278 : vector<8x1x128xf32> to vector<8x128xf32>
    %280 = vector.shape_cast %277 : vector<8x128xf32> to vector<8x1x128xf32>
    tpu.vector_store %arg7[%c0_71, %c7, %c0_72], %280 {strides = array<i32>} : memref<8x8x128xf32, #tpu.memory_space<vmem>>, vector<8x1x128xf32>,
    %c0_73 = arith.constant 0 : index
    %c0_74 = arith.constant 0 : index
    %281 = vector.load %arg8[%c0_73, %c0_74] : memref<8x128xf32, #tpu.memory_space<vmem>>, vector<8x128xf32>
    tpu.vector_store %arg8[%c0_73, %c0_74], %277 {strides = array<i32>} : memref<8x128xf32, #tpu.memory_space<vmem>>, vector<8x128xf32>,
    return
  }
  func.func @transform_0(%arg0: i32, %arg1: i32) -> (i32, i32, i32) {
    %c0_i32 = arith.constant 0 : i32
    %c0_i32_0 = arith.constant 0 : i32
    return %arg1, %arg0, %c0_i32 : i32, i32, i32
  }
  func.func @transform_1(%arg0: i32, %arg1: i32) -> (i32, i32) {
    %c0_i32 = arith.constant 0 : i32
    %c0_i32_0 = arith.constant 0 : i32
    %c0_i32_1 = arith.constant 0 : i32
    return %c0_i32, %c0_i32_0 : i32, i32
  }
  func.func @transform_2(%arg0: i32, %arg1: i32) -> (i32, i32) {
    %c0_i32 = arith.constant 0 : i32
    %c0_i32_0 = arith.constant 0 : i32
    %c0_i32_1 = arith.constant 0 : i32
    return %c0_i32, %c0_i32_0 : i32, i32
  }
  func.func @transform_3(%arg0: i32, %arg1: i32) -> (i32, i32) {
    %c0_i32 = arith.constant 0 : i32
    %c0_i32_0 = arith.constant 0 : i32
    %c0_i32_1 = arith.constant 0 : i32
    return %c0_i32, %c0_i32_0 : i32, i32
  }
  func.func @transform_4(%arg0: i32, %arg1: i32) -> (i32, i32) {
    %c0_i32 = arith.constant 0 : i32
    %c0_i32_0 = arith.constant 0 : i32
    %c0_i32_1 = arith.constant 0 : i32
    return %c0_i32, %c0_i32_0 : i32, i32
  }
  func.func @transform_5(%arg0: i32, %arg1: i32) -> (i32, i32, i32) {
    %c0_i32 = arith.constant 0 : i32
    %c0_i32_0 = arith.constant 0 : i32
    return %arg0, %arg1, %c0_i32 : i32, i32, i32
  }
  func.func @transform_6(%arg0: i32, %arg1: i32) -> (i32, i32) {
    %c0_i32 = arith.constant 0 : i32
    %c0_i32_0 = arith.constant 0 : i32
    return %arg0, %c0_i32 : i32, i32
  }
}

</mosaic_0001>

<llo_original>
// kernel: tpu_custom_call.1
$region0: #{tpu_custom_call.1}
  #allocation0 [shape = 'u32[]', space=smem, size = 0x4, offset = 0x4, fixed_abs, tag = 'smem constant byte address 0x4 - core index']
  #allocation1 [shape = 'u32[144,128]{1,0:T(1,128)}', space=vmem, size = 0x12000, scoped, tag = 'internal scratch']
  #allocation2 [shape = 'f32[64,384]{1,0:T(8,128)}', space=vmem, size = 0x18000, scoped, tag = 'scratch operand']
  %s0 = inlined_call_operand.hbm [shape: f32[8,8,32], index: 0, kind: input, shape index: {}]
  %s1 = inlined_call_operand.hbm [shape: bf16[32,384], index: 1, kind: input, shape index: {}]
  %s2 = inlined_call_operand.hbm [shape: bf16[128,384], index: 2, kind: input, shape index: {}]
  %s3 = inlined_call_operand.vmem [shape: f32[1,384], index: 3, kind: input, shape index: {}]
  %s4 = inlined_call_operand.vmem [shape: f32[1,128], index: 4, kind: input, shape index: {}]
  %s5 = inlined_call_operand.hbm [shape: f32[8,8,128], index: 5, kind: output, shape index: {0}]
  %s6 = inlined_call_operand.hbm [shape: f32[8,128], index: 6, kind: output, shape index: {1}]
  %7 = xla_tuple %s5, %s6
  %s8 = sld [smem:[#allocation0]]
  $region54: #{tpu_custom_call.1} parent=0
    _
  %s10 = ssub.s32 1, %s8
  %s11 = scalar_select 0, %s10, %s8
  $region1: #{tpu_custom_call.1} parent=0
    #allocation3 [shape = 'u8[32768]{0}', space=vmem, size = 0x8000, scoped, tag = 'input window, operand 0, single buffered']
    #allocation4 [shape = 's32[1]{0}', space=sflag, size = 0x4, scoped, tag = 'scoped memory for tpu_custom_call.1']
    #allocation5 [shape = 's32[1]{0}', space=sflag, size = 0x4, scoped, tag = 'scoped memory for tpu_custom_call.1']
    #allocation6 [shape = 'u8[24576]{0}', space=vmem, size = 0x6000, scoped, tag = 'input window, operand 1, single buffered']
    #allocation7 [shape = 's32[1]{0}', space=sflag, size = 0x4, scoped, tag = 'scoped memory for tpu_custom_call.1']
    #allocation8 [shape = 'u8[98304]{0}', space=vmem, size = 0x18000, scoped, tag = 'input window, operand 2, single buffered']
    #allocation9 [shape = 'u8[32768]{0}', space=vmem, size = 0x8000, scoped, tag = 'output window, operand 0, single buffered']
    #allocation10 [shape = 'u8[4096]{0}', space=vmem, size = 0x1000, scoped, tag = 'output window, operand 1, single buffered']
    #allocation11 [shape = 's32[1]{0}', space=sflag, size = 0x4, scoped, tag = 'scoped memory for tpu_custom_call.1']
    %12 = vsyncpa [#allocation4], 0
    %13 = vsyncpa [#allocation7], 0
    %14 = vsyncpa [#allocation5], 0
    %15 = vsyncpa [#allocation11], 0
    // Predicated region
    $region2: #{tpu_custom_call.1} parent=1 // pred_check
      _
    $region3: #{tpu_custom_call.1} parent=1 // pred_check_branch
      %17 = sbr.rel (0) target = $region5
    $region4: #{tpu_custom_call.1} parent=1 // pred_region
      %s19 = ssub.s32 1024, 1024
      %20 = vsyncadd [#allocation4], %s19
      %s21 = sshll.u32 [#allocation3], 4
      %s22 = int_to_ptr.vmem [resolvable:$true] %s21
      %27 = dma.hbm_to_vmem [thread:$0]  %s0, 1024, %s22, [#allocation4], 128, 128, 8
    $region5: #{tpu_custom_call.1} parent=1 // pred_fallthru
      _
    // Predicated region
    $region6: #{tpu_custom_call.1} parent=1 // pred_check
      _
    $region7: #{tpu_custom_call.1} parent=1 // pred_check_branch
      %29 = sbr.rel (0) target = $region9
    $region8: #{tpu_custom_call.1} parent=1 // pred_region
      %s31 = ssub.s32 768, 768
      %32 = vsyncadd [#allocation7], %s31
      %s33 = sshll.u32 [#allocation6], 4
      %s34 = int_to_ptr.vmem [resolvable:$true] %s33
      %39 = dma.hbm_to_vmem [thread:$0]  %s1, 768, %s34, [#allocation7], 192, 192, 12
    $region9: #{tpu_custom_call.1} parent=1 // pred_fallthru
      _
    // Predicated region
    $region10: #{tpu_custom_call.1} parent=1 // pred_check
      _
    $region11: #{tpu_custom_call.1} parent=1 // pred_check_branch
      %41 = sbr.rel (0) target = $region13
    $region12: #{tpu_custom_call.1} parent=1 // pred_region
      %s43 = ssub.s32 3072, 3072
      %44 = vsyncadd [#allocation7], %s43
      %s45 = sshll.u32 [#allocation8], 4
      %s46 = int_to_ptr.vmem [resolvable:$true] %s45
      %51 = dma.hbm_to_vmem [thread:$0]  %s2, 3072, %s46, [#allocation7], 192, 192, 12
    $region13: #{tpu_custom_call.1} parent=1 // pred_fallthru
      _
    // Predicated region
    $region14: #{tpu_custom_call.1} parent=1 // pred_check
      _
    $region15: #{tpu_custom_call.1} parent=1 // pred_check_branch
      %53 = sbr.rel (0) target = $region17
    $region16: #{tpu_custom_call.1} parent=1 // pred_region
      _
    $region17: #{tpu_custom_call.1} parent=1 // pred_fallthru
      _
    // Predicated region
    $region18: #{tpu_custom_call.1} parent=1 // pred_check
      _
    $region19: #{tpu_custom_call.1} parent=1 // pred_check_branch
      %55 = sbr.rel (0) target = $region21
    $region20: #{tpu_custom_call.1} parent=1 // pred_region
      _
    $region21: #{tpu_custom_call.1} parent=1 // pred_fallthru
      _
    // Predicated region
    $region22: #{tpu_custom_call.1} parent=1 // pred_check
      _
    $region23: #{tpu_custom_call.1} parent=1 // pred_check_branch
      %57 = sbr.rel (0) target = $region25
    $region24: #{tpu_custom_call.1} parent=1 // pred_region
      %58 = dma.done [#allocation4], 1024
    $region25: #{tpu_custom_call.1} parent=1 // pred_fallthru
      _
    // Predicated region
    $region26: #{tpu_custom_call.1} parent=1 // pred_check
      _
    $region27: #{tpu_custom_call.1} parent=1 // pred_check_branch
      %60 = sbr.rel (0) target = $region29
    $region28: #{tpu_custom_call.1} parent=1 // pred_region
      %61 = dma.done [#allocation7], 768
    $region29: #{tpu_custom_call.1} parent=1 // pred_fallthru
      _
    // Predicated region
    $region30: #{tpu_custom_call.1} parent=1 // pred_check
      _
    $region31: #{tpu_custom_call.1} parent=1 // pred_check_branch
      %63 = sbr.rel (0) target = $region33
    $region32: #{tpu_custom_call.1} parent=1 // pred_region
      %64 = dma.done [#allocation7], 3072
    $region33: #{tpu_custom_call.1} parent=1 // pred_fallthru
      _
    %p66 = scmp.eq.s32.totalorder 0, 0
    // Predicated region
    $region34: #{tpu_custom_call.1} parent=1 // pred_check
      %p67 = pneg %p66
    $region35: #{tpu_custom_call.1} parent=1 // pred_check_branch
      %69 = sbr.rel (%p67) target = $region37
    $region36: #{tpu_custom_call.1} parent=1 // pred_region
      %70 = vst [vmem:[#allocation10] sm:$0xff] 0.0
    $region37: #{tpu_custom_call.1} parent=1 // pred_fallthru
      _
    %v71 = vld [vmem:[#allocation3] sm:$0xff]
    %v72 = vld [vmem:[#allocation3 + $0x8] sm:$0xff]
    %v73 = vld [vmem:[#allocation3 + $0x10] sm:$0xff]
    %v74 = vld [vmem:[#allocation3 + $0x18] sm:$0xff]
    %v75 = vld [vmem:[#allocation3 + $0x20] sm:$0xff]
    %v76 = vld [vmem:[#allocation3 + $0x28] sm:$0xff]
    %v77 = vld [vmem:[#allocation3 + $0x30] sm:$0xff]
    %v78 = vld [vmem:[#allocation3 + $0x38] sm:$0xff]
    %v79 = vpack.c.bf16 %v72, %v71
    %v80 = vpack.c.bf16 %v74, %v73
    %v81 = vpack.c.bf16 %v76, %v75
    %v82 = vpack.c.bf16 %v78, %v77
    %v83 = vld [vmem:[#allocation6] sm:$0xff]
    %v84 = vld [vmem:[#allocation6 + $0x8] sm:$0xf]
    %v85 = vld [vmem:[#allocation6 + $0xc] sm:$0xff]
    %v86 = vld [vmem:[#allocation6 + $0x14] sm:$0xf]
    %v87 = vld [vmem:[#allocation6 + $0x18] sm:$0xff]
    %v88 = vld [vmem:[#allocation6 + $0x20] sm:$0xf]
    %v89 = vld [vmem:[#allocation6 + $0x24] sm:$0xff]
    %v90 = vld [vmem:[#allocation6 + $0x2c] sm:$0xf]
    %v91 = vld [vmem:[%s3] sm:$0x7]
    %v93 = vlaneseq
    %v94 = vshrl.u32 %v93, 7
    %v95 = vsub.s32 0, %v94
    %v96 = vrot.slane %v91, %v95
    %v97 = vlaneseq
    %v98 = vshrl.u32 %v97, 7
    %v99 = vsub.s32 1, %v98
    %v100 = vrot.slane %v91, %v99
    %v101 = vlaneseq
    %v102 = vshrl.u32 %v101, 7
    %v103 = vsub.s32 2, %v102
    %v104 = vrot.slane %v91, %v103
    %v116 = vunpack.c.l.b16 %v83
    %v117 = vunpack.c.h.b16 %v83
    %v118 = vunpack.c.l.b16 %v84
    %v119 = vunpack.c.l.b16 %v85
    %v120 = vunpack.c.h.b16 %v85
    %v121 = vunpack.c.l.b16 %v86
    %v122 = vunpack.c.l.b16 %v87
    %v123 = vunpack.c.h.b16 %v87
    %v124 = vunpack.c.l.b16 %v88
    %v125 = vunpack.c.l.b16 %v89
    %v126 = vunpack.c.h.b16 %v89
    %v127 = vunpack.c.l.b16 %v90
    %v128 = vpack.c.b16 %v119, %v116
    %v129 = vpack.c.b16 %v120, %v117
    %v130 = vpack.c.b16 %v121, %v118
    %v131 = vpack.c.b16 %v125, %v122
    %v132 = vpack.c.b16 %v126, %v123
    %v133 = vpack.c.b16 %v127, %v124
    %vm140 = vcmask 261120
    %v142 = vsel %vm140, %v79, 0
    %v145 = vsel %vm140, %v80, 0
    %v148 = vsel %vm140, %v81, 0
    %v151 = vsel %vm140, %v82, 0
    %153 = vmatprep.subr.bf16.mxu0 0
    %154 = vmatpush1.bf16.msra.mxu0 0
    %155 = vmatprep.subr.bf16.mxu0 0
    %156 = vmatpush1.bf16.msra.mxu0 0
    %157 = vmatprep.subr.bf16.mxu0 0
    %158 = vmatpush1.bf16.msra.mxu0 0
    %159 = vmatprep.subr.bf16.mxu0 0
    %160 = vmatpush1.bf16.msra.mxu0 0
    %161 = vmatprep.subr.bf16.mxu0 0
    %162 = vmatpush1.bf16.msra.mxu0 0
    %163 = vmatprep.subr.bf16.mxu0 0
    %164 = vmatpush1.bf16.msra.mxu0 0
    %165 = vmatprep.subr.bf16.mxu0 %v132
    %166 = vmatpush1.bf16.msra.mxu0 %v131
    %167 = vmatprep.subr.bf16.mxu0 %v129
    %168 = vmatpush1.bf16.msra.mxu0 %v128
    %169 = vmatprep.subr.bf16.mxu0 0
    %170 = vmatpush2.bf16.msra.mxu0 0
    %171 = vmatprep.subr.bf16.mxu0 0
    %172 = vmatpush2.bf16.msra.mxu0 0
    %173 = vmatprep.subr.bf16.mxu0 0
    %174 = vmatpush2.bf16.msra.mxu0 0
    %175 = vmatprep.subr.bf16.mxu0 0
    %176 = vmatpush2.bf16.msra.mxu0 0
    %177 = vmatprep.subr.bf16.mxu0 0
    %178 = vmatpush2.bf16.msra.mxu0 0
    %179 = vmatprep.subr.bf16.mxu0 0
    %180 = vmatpush2.bf16.msra.mxu0 0
    %181 = vmatprep.subr.bf16.mxu0 0
    %182 = vmatpush2.bf16.msra.mxu0 0
    %183 = vmatprep.subr.bf16.mxu0 0
    %184 = vmatpush2.bf16.msra.mxu0 0
    %185 = vmatprep.mubr.bf16.mxu0 0
    %186 = vmatmul.mubr.bf16.gmra.mxu0 %v142
    %v187 = vpop.f32.mrf.mxu0
    %v188 = vadd.f32 %v96, %v187
    %v189 = vpop.f32.mrf.mxu0
    %v190 = vadd.f32 %v100, %v189
    %v191 = vpop.f32.mrf.mxu0
    %v192 = vadd.f32 %v96, %v191
    %v193 = vpop.f32.mrf.mxu0
    %v194 = vadd.f32 %v100, %v193
    %195 = vmatprep.mubr.bf16.mxu0 0
    %196 = vmatmul.mubr.bf16.gmra.mxu0 %v145
    %v197 = vpop.f32.mrf.mxu0
    %v198 = vadd.f32 %v96, %v197
    %v199 = vpop.f32.mrf.mxu0
    %v200 = vadd.f32 %v100, %v199
    %v201 = vpop.f32.mrf.mxu0
    %v202 = vadd.f32 %v96, %v201
    %v203 = vpop.f32.mrf.mxu0
    %v204 = vadd.f32 %v100, %v203
    %205 = vmatprep.mubr.bf16.mxu0 0
    %206 = vmatmul.mubr.bf16.gmra.mxu0 %v148
    %v207 = vpop.f32.mrf.mxu0
    %v208 = vadd.f32 %v96, %v207
    %v209 = vpop.f32.mrf.mxu0
    %v210 = vadd.f32 %v100, %v209
    %v211 = vpop.f32.mrf.mxu0
    %v212 = vadd.f32 %v96, %v211
    %v213 = vpop.f32.mrf.mxu0
    %v214 = vadd.f32 %v100, %v213
    %215 = vmatprep.mubr.bf16.mxu0 0
    %216 = vmatmul.mubr.bf16.gmra.mxu0 %v151
    %v217 = vpop.f32.mrf.mxu0
    %v218 = vadd.f32 %v96, %v217
    %v219 = vpop.f32.mrf.mxu0
    %v220 = vadd.f32 %v100, %v219
    %v221 = vpop.f32.mrf.mxu0
    %v222 = vadd.f32 %v96, %v221
    %v223 = vpop.f32.mrf.mxu0
    %v224 = vadd.f32 %v100, %v223
    %225 = vdwg.mxu0
    %226 = vmatprep.subr.bf16.mxu0 0
    %227 = vmatpush1.bf16.msra.mxu0 0
    %228 = vmatprep.subr.bf16.mxu0 0
    %229 = vmatpush1.bf16.msra.mxu0 0
    %230 = vmatprep.subr.bf16.mxu0 0
    %231 = vmatpush1.bf16.msra.mxu0 0
    %232 = vmatprep.subr.bf16.mxu0 0
    %233 = vmatpush1.bf16.msra.mxu0 0
    %234 = vmatprep.subr.bf16.mxu0 0
    %235 = vmatpush1.bf16.msra.mxu0 0
    %236 = vmatprep.subr.bf16.mxu0 0
    %237 = vmatpush1.bf16.msra.mxu0 0
    %238 = vmatprep.subr.bf16.mxu0 0
    %239 = vmatpush1.bf16.msra.mxu0 %v133
    %240 = vmatprep.subr.bf16.mxu0 0
    %241 = vmatpush1.bf16.msra.mxu0 %v130
    %242 = vmatprep.subr.bf16.mxu0 0
    %243 = vmatpush2.bf16.msra.mxu0 0
    %244 = vmatprep.subr.bf16.mxu0 0
    %245 = vmatpush2.bf16.msra.mxu0 0
    %246 = vmatprep.subr.bf16.mxu0 0
    %247 = vmatpush2.bf16.msra.mxu0 0
    %248 = vmatprep.subr.bf16.mxu0 0
    %249 = vmatpush2.bf16.msra.mxu0 0
    %250 = vmatprep.subr.bf16.mxu0 0
    %251 = vmatpush2.bf16.msra.mxu0 0
    %252 = vmatprep.subr.bf16.mxu0 0
    %253 = vmatpush2.bf16.msra.mxu0 0
    %254 = vmatprep.subr.bf16.mxu0 0
    %255 = vmatpush2.bf16.msra.mxu0 0
    %256 = vmatprep.subr.bf16.mxu0 0
    %257 = vmatpush2.bf16.msra.mxu0 0
    %258 = vmatprep.mubr.bf16.mxu0 0
    %259 = vmatmul.mubr.bf16.gmra.mxu0 %v142
    %v260 = vpop.f32.mrf.mxu0
    %v261 = vadd.f32 %v104, %v260
    %v262 = vpop.f32.mrf.mxu0
    %v263 = vpop.f32.mrf.mxu0
    %v264 = vadd.f32 %v104, %v263
    %v265 = vpop.f32.mrf.mxu0
    %266 = vmatprep.mubr.bf16.mxu0 0
    %267 = vmatmul.mubr.bf16.gmra.mxu0 %v145
    %v268 = vpop.f32.mrf.mxu0
    %v269 = vadd.f32 %v104, %v268
    %v270 = vpop.f32.mrf.mxu0
    %v271 = vpop.f32.mrf.mxu0
    %v272 = vadd.f32 %v104, %v271
    %v273 = vpop.f32.mrf.mxu0
    %274 = vmatprep.mubr.bf16.mxu0 0
    %275 = vmatmul.mubr.bf16.gmra.mxu0 %v148
    %v276 = vpop.f32.mrf.mxu0
    %v277 = vadd.f32 %v104, %v276
    %v278 = vpop.f32.mrf.mxu0
    %v279 = vpop.f32.mrf.mxu0
    %v280 = vadd.f32 %v104, %v279
    %v281 = vpop.f32.mrf.mxu0
    %282 = vmatprep.mubr.bf16.mxu0 0
    %283 = vmatmul.mubr.bf16.gmra.mxu0 %v151
    %v284 = vpop.f32.mrf.mxu0
    %v285 = vadd.f32 %v104, %v284
    %v286 = vpop.f32.mrf.mxu0
    %v287 = vpop.f32.mrf.mxu0
    %v288 = vadd.f32 %v104, %v287
    %v289 = vpop.f32.mrf.mxu0
    %290 = vdwg.mxu0
    %291 = vst [vmem:[#allocation2] sm:$0xff] %v188
    %292 = vst [vmem:[#allocation2 + $0x8] sm:$0xff] %v190
    %293 = vst [vmem:[#allocation2 + $0x10] sm:$0xff] %v261
    %294 = vst [vmem:[#allocation2 + $0x18] sm:$0xff] %v192
    %295 = vst [vmem:[#allocation2 + $0x20] sm:$0xff] %v194
    %296 = vst [vmem:[#allocation2 + $0x28] sm:$0xff] %v264
    %297 = vst [vmem:[#allocation2 + $0x30] sm:$0xff] %v198
    %298 = vst [vmem:[#allocation2 + $0x38] sm:$0xff] %v200
    %299 = vst [vmem:[#allocation2 + $0x40] sm:$0xff] %v269
    %300 = vst [vmem:[#allocation2 + $0x48] sm:$0xff] %v202
    %301 = vst [vmem:[#allocation2 + $0x50] sm:$0xff] %v204
    %302 = vst [vmem:[#allocation2 + $0x58] sm:$0xff] %v272
    %303 = vst [vmem:[#allocation2 + $0x60] sm:$0xff] %v208
    %304 = vst [vmem:[#allocation2 + $0x68] sm:$0xff] %v210
    %305 = vst [vmem:[#allocation2 + $0x70] sm:$0xff] %v277
    %306 = vst [vmem:[#allocation2 + $0x78] sm:$0xff] %v212
    %307 = vst [vmem:[#allocation2 + $0x80] sm:$0xff] %v214
    %308 = vst [vmem:[#allocation2 + $0x88] sm:$0xff] %v280
    %309 = vst [vmem:[#allocation2 + $0x90] sm:$0xff] %v218
    %310 = vst [vmem:[#allocation2 + $0x98] sm:$0xff] %v220
    %311 = vst [vmem:[#allocation2 + $0xa0] sm:$0xff] %v285
    %312 = vst [vmem:[#allocation2 + $0xa8] sm:$0xff] %v222
    %313 = vst [vmem:[#allocation2 + $0xb0] sm:$0xff] %v224
    %314 = vst [vmem:[#allocation2 + $0xb8] sm:$0xff] %v288
    %v315 = vld [vmem:[#allocation8] sm:$0xff]
    %v316 = vld [vmem:[#allocation8 + $0x8] sm:$0xf]
    %v317 = vld [vmem:[#allocation8 + $0xc] sm:$0xff]
    %v318 = vld [vmem:[#allocation8 + $0x14] sm:$0xf]
    %v319 = vld [vmem:[#allocation8 + $0x18] sm:$0xff]
    %v320 = vld [vmem:[#allocation8 + $0x20] sm:$0xf]
    %v321 = vld [vmem:[#allocation8 + $0x24] sm:$0xff]
    %v322 = vld [vmem:[#allocation8 + $0x2c] sm:$0xf]
    %v323 = vld [vmem:[#allocation8 + $0x30] sm:$0xff]
    %v324 = vld [vmem:[#allocation8 + $0x38] sm:$0xf]
    %v325 = vld [vmem:[#allocation8 + $0x3c] sm:$0xff]
    %v326 = vld [vmem:[#allocation8 + $0x44] sm:$0xf]
    %v327 = vld [vmem:[#allocation8 + $0x48] sm:$0xff]
    %v328 = vld [vmem:[#allocation8 + $0x50] sm:$0xf]
    %v329 = vld [vmem:[#allocation8 + $0x54] sm:$0xff]
    %v330 = vld [vmem:[#allocation8 + $0x5c] sm:$0xf]
    %v331 = vld [vmem:[#allocation8 + $0x60] sm:$0xff]
    %v332 = vld [vmem:[#allocation8 + $0x68] sm:$0xf]
    %v333 = vld [vmem:[#allocation8 + $0x6c] sm:$0xff]
    %v334 = vld [vmem:[#allocation8 + $0x74] sm:$0xf]
    %v335 = vld [vmem:[#allocation8 + $0x78] sm:$0xff]
    %v336 = vld [vmem:[#allocation8 + $0x80] sm:$0xf]
    %v337 = vld [vmem:[#allocation8 + $0x84] sm:$0xff]
    %v338 = vld [vmem:[#allocation8 + $0x8c] sm:$0xf]
    %v339 = vld [vmem:[#allocation8 + $0x90] sm:$0xff]
    %v340 = vld [vmem:[#allocation8 + $0x98] sm:$0xf]
    %v341 = vld [vmem:[#allocation8 + $0x9c] sm:$0xff]
    %v342 = vld [vmem:[#allocation8 + $0xa4] sm:$0xf]
    %v343 = vld [vmem:[#allocation8 + $0xa8] sm:$0xff]
    %v344 = vld [vmem:[#allocation8 + $0xb0] sm:$0xf]
    %v345 = vld [vmem:[#allocation8 + $0xb4] sm:$0xff]
    %v346 = vld [vmem:[#allocation8 + $0xbc] sm:$0xf]
    %v347 = vld [vmem:[%s4] sm:$0x1]
    %v349 = vlaneseq
    %v350 = vshrl.u32 %v349, 7
    %v351 = vsub.s32 0, %v350
    %v352 = vrot.slane %v347, %v351
    %v354 = vld [vmem:[#allocation10] sm:$0xff]
    %v355 = vld [vmem:[#allocation2] sm:$0xff]
    %v356 = vld [vmem:[#allocation2 + $0x8] sm:$0xff]
    %v357 = vld [vmem:[#allocation2 + $0x10] sm:$0xff]
    %v358 = vpack.c.bf16 %v354, %v354
    %v391 = vunpack.c.l.b16 %v315
    %v392 = vunpack.c.h.b16 %v315
    %v393 = vunpack.c.l.b16 %v316
    %v394 = vunpack.c.l.b16 %v317
    %v395 = vunpack.c.h.b16 %v317
    %v396 = vunpack.c.l.b16 %v318
    %v397 = vunpack.c.l.b16 %v319
    %v398 = vunpack.c.h.b16 %v319
    %v399 = vunpack.c.l.b16 %v320
    %v400 = vunpack.c.l.b16 %v321
    %v401 = vunpack.c.h.b16 %v321
    %v402 = vunpack.c.l.b16 %v322
    %v403 = vunpack.c.l.b16 %v323
    %v404 = vunpack.c.h.b16 %v323
    %v405 = vunpack.c.l.b16 %v324
    %v406 = vunpack.c.l.b16 %v325
    %v407 = vunpack.c.h.b16 %v325
    %v408 = vunpack.c.l.b16 %v326
    %v409 = vunpack.c.l.b16 %v327
    %v410 = vunpack.c.h.b16 %v327
    %v411 = vunpack.c.l.b16 %v328
    %v412 = vunpack.c.l.b16 %v329
    %v413 = vunpack.c.h.b16 %v329
    %v414 = vunpack.c.l.b16 %v330
    %v415 = vunpack.c.l.b16 %v331
    %v416 = vunpack.c.h.b16 %v331
    %v417 = vunpack.c.l.b16 %v332
    %v418 = vunpack.c.l.b16 %v333
    %v419 = vunpack.c.h.b16 %v333
    %v420 = vunpack.c.l.b16 %v334
    %v421 = vunpack.c.l.b16 %v335
    %v422 = vunpack.c.h.b16 %v335
    %v423 = vunpack.c.l.b16 %v336
    %v424 = vunpack.c.l.b16 %v337
    %v425 = vunpack.c.h.b16 %v337
    %v426 = vunpack.c.l.b16 %v338
    %v427 = vunpack.c.l.b16 %v339
    %v428 = vunpack.c.h.b16 %v339
    %v429 = vunpack.c.l.b16 %v340
    %v430 = vunpack.c.l.b16 %v341
    %v431 = vunpack.c.h.b16 %v341
    %v432 = vunpack.c.l.b16 %v342
    %v433 = vunpack.c.l.b16 %v343
    %v434 = vunpack.c.h.b16 %v343
    %v435 = vunpack.c.l.b16 %v344
    %v436 = vunpack.c.l.b16 %v345
    %v437 = vunpack.c.h.b16 %v345
    %v438 = vunpack.c.l.b16 %v346
    %v439 = vpack.c.b16 %v394, %v391
    %v440 = vpack.c.b16 %v395, %v392
    %v441 = vpack.c.b16 %v396, %v393
    %v442 = vpack.c.b16 %v400, %v397
    %v443 = vpack.c.b16 %v401, %v398
    %v444 = vpack.c.b16 %v402, %v399
    %v445 = vpack.c.b16 %v406, %v403
    %v446 = vpack.c.b16 %v407, %v404
    %v447 = vpack.c.b16 %v408, %v405
    %v448 = vpack.c.b16 %v412, %v409
    %v449 = vpack.c.b16 %v413, %v410
    %v450 = vpack.c.b16 %v414, %v411
    %v451 = vpack.c.b16 %v418, %v415
    %v452 = vpack.c.b16 %v419, %v416
    %v453 = vpack.c.b16 %v420, %v417
    %v454 = vpack.c.b16 %v424, %v421
    %v455 = vpack.c.b16 %v425, %v422
    %v456 = vpack.c.b16 %v426, %v423
    %v457 = vpack.c.b16 %v430, %v427
    %v458 = vpack.c.b16 %v431, %v428
    %v459 = vpack.c.b16 %v432, %v429
    %v460 = vpack.c.b16 %v436, %v433
    %v461 = vpack.c.b16 %v437, %v434
    %v462 = vpack.c.b16 %v438, %v435
    %487 = vmatprep.subr.bf16.mxu0 %v461
    %488 = vmatpush1.bf16.msra.mxu0 %v460
    %489 = vmatprep.subr.bf16.mxu0 %v458
    %490 = vmatpush1.bf16.msra.mxu0 %v457
    %491 = vmatprep.subr.bf16.mxu0 %v455
    %492 = vmatpush1.bf16.msra.mxu0 %v454
    %493 = vmatprep.subr.bf16.mxu0 %v452
    %494 = vmatpush1.bf16.msra.mxu0 %v451
    %495 = vmatprep.subr.bf16.mxu0 %v449
    %496 = vmatpush1.bf16.msra.mxu0 %v448
    %497 = vmatprep.subr.bf16.mxu0 %v446
    %498 = vmatpush1.bf16.msra.mxu0 %v445
    %499 = vmatprep.subr.bf16.mxu0 %v443
    %500 = vmatpush1.bf16.msra.mxu0 %v442
    %501 = vmatprep.subr.bf16.mxu0 %v440
    %502 = vmatpush1.bf16.msra.mxu0 %v439
    %503 = vmatprep.subr.bf16.mxu0 0
    %504 = vmatpush2.bf16.msra.mxu0 0
    %505 = vmatprep.subr.bf16.mxu0 0
    %506 = vmatpush2.bf16.msra.mxu0 0
    %507 = vmatprep.subr.bf16.mxu0 0
    %508 = vmatpush2.bf16.msra.mxu0 0
    %509 = vmatprep.subr.bf16.mxu0 0
    %510 = vmatpush2.bf16.msra.mxu0 0
    %511 = vmatprep.subr.bf16.mxu0 0
    %512 = vmatpush2.bf16.msra.mxu0 0
    %513 = vmatprep.subr.bf16.mxu0 0
    %514 = vmatpush2.bf16.msra.mxu0 0
    %515 = vmatprep.subr.bf16.mxu0 0
    %516 = vmatpush2.bf16.msra.mxu0 0
    %517 = vmatprep.subr.bf16.mxu0 0
    %518 = vmatpush2.bf16.msra.mxu0 0
    %519 = vmatprep.mubr.bf16.mxu0 0
    %520 = vmatmul.mubr.bf16.gmra.mxu0 %v358
    %v521 = vpop.f32.mrf.mxu0
    %v522 = vadd.f32 0.0, %v521
    %v523 = vpop.f32.mrf.mxu0
    %v524 = vadd.f32 0.0, %v523
    %v525 = vpop.f32.mrf.mxu0
    %v526 = vpop.f32.mrf.mxu0
    %527 = vdwg.mxu0
    %528 = vmatprep.subr.bf16.mxu0 0
    %529 = vmatpush1.bf16.msra.mxu0 %v462
    %530 = vmatprep.subr.bf16.mxu0 0
    %531 = vmatpush1.bf16.msra.mxu0 %v459
    %532 = vmatprep.subr.bf16.mxu0 0
    %533 = vmatpush1.bf16.msra.mxu0 %v456
    %534 = vmatprep.subr.bf16.mxu0 0
    %535 = vmatpush1.bf16.msra.mxu0 %v453
    %536 = vmatprep.subr.bf16.mxu0 0
    %537 = vmatpush1.bf16.msra.mxu0 %v450
    %538 = vmatprep.subr.bf16.mxu0 0
    %539 = vmatpush1.bf16.msra.mxu0 %v447
    %540 = vmatprep.subr.bf16.mxu0 0
    %541 = vmatpush1.bf16.msra.mxu0 %v444
    %542 = vmatprep.subr.bf16.mxu0 0
    %543 = vmatpush1.bf16.msra.mxu0 %v441
    %544 = vmatprep.subr.bf16.mxu0 0
    %545 = vmatpush2.bf16.msra.mxu0 0
    %546 = vmatprep.subr.bf16.mxu0 0
    %547 = vmatpush2.bf16.msra.mxu0 0
    %548 = vmatprep.subr.bf16.mxu0 0
    %549 = vmatpush2.bf16.msra.mxu0 0
    %550 = vmatprep.subr.bf16.mxu0 0
    %551 = vmatpush2.bf16.msra.mxu0 0
    %552 = vmatprep.subr.bf16.mxu0 0
    %553 = vmatpush2.bf16.msra.mxu0 0
    %554 = vmatprep.subr.bf16.mxu0 0
    %555 = vmatpush2.bf16.msra.mxu0 0
    %556 = vmatprep.subr.bf16.mxu0 0
    %557 = vmatpush2.bf16.msra.mxu0 0
    %558 = vmatprep.subr.bf16.mxu0 0
    %559 = vmatpush2.bf16.msra.mxu0 0
    %560 = vmatprep.mubr.bf16.mxu0 0
    %561 = vmatmul.mubr.bf16.gmra.mxu0 %v358
    %v562 = vpop.f32.mrf.mxu0
    %v563 = vadd.f32 0.0, %v562
    %v564 = vpop.f32.mrf.mxu0
    %v565 = vpop.f32.mrf.mxu0
    %v566 = vpop.f32.mrf.mxu0
    %567 = vdwg.mxu0
    %v568 = vadd.f32 %v355, %v522
    %v569 = vxor.u32 %v568, 2147483648
    %v570 = vmul.f32 %v569, 1.442695
    %v571 = vpow.pop %v570
    %v572 = vadd.f32 %v571, 1.0
    %v573 = vrcp.pop %v572
    %v574 = vmul.f32 1.0, %v573
    %v575 = vadd.f32 %v356, %v524
    %v576 = vxor.u32 %v575, 2147483648
    %v577 = vmul.f32 %v576, 1.442695
    %v578 = vpow.pop %v577
    %v579 = vadd.f32 %v578, 1.0
    %v580 = vrcp.pop %v579
    %v581 = vmul.f32 1.0, %v580
    %v582 = vadd.f32 %v563, %v352
    %v583 = vmul.f32 %v574, %v582
    %v584 = vadd.f32 %v357, %v583
    %v585 = vtanh.pop %v584
    %v586 = vsub.f32 1.0, %v581
    %v587 = vmul.f32 %v586, %v585
    %v588 = vmul.f32 %v581, %v354
    %v589 = vadd.f32 %v587, %v588
    %v591 = vcombine.high %v589, %v589
    %v593 = vunpack.c.l.s4 1966171168
    %v594 = vunpack.c.0.s8 %v593
    %v595 = vlaneseq
    %v596 = vshrl.u32 %v595, 7
    %v597 = vsub.s32 %v594, %v596
    %v598 = vrot.slane %v589, %v597
    %v600 = vunpack.c.l.s4 1966171168
    %v601 = vunpack.c.0.s8 %v600
    %v602 = vlaneseq
    %v603 = vshrl.u32 %v602, 7
    %v604 = vsub.s32 %v601, %v603
    %v605 = vrot.slane %v591, %v604
    %v606 = vcombine.high %v598, %v598
    %v607 = vcombine.high %v605, %v605
    %v609 = vunpack.c.l.s4 1966171168
    %v610 = vunpack.c.0.s8 %v609
    %v611 = vlaneseq
    %v612 = vshrl.u32 %v611, 7
    %v613 = vsub.s32 %v610, %v612
    %v614 = vrot.slane %v598, %v613
    %v616 = vunpack.c.l.s4 1966171168
    %v617 = vunpack.c.0.s8 %v616
    %v618 = vlaneseq
    %v619 = vshrl.u32 %v618, 7
    %v620 = vsub.s32 %v617, %v619
    %v621 = vrot.slane %v605, %v620
    %v623 = vunpack.c.l.s4 1966171168
    %v624 = vunpack.c.0.s8 %v623
    %v625 = vlaneseq
    %v626 = vshrl.u32 %v625, 7
    %v627 = vsub.s32 %v624, %v626
    %v628 = vrot.slane %v606, %v627
    %v630 = vunpack.c.l.s4 1966171168
    %v631 = vunpack.c.0.s8 %v630
    %v632 = vlaneseq
    %v633 = vshrl.u32 %v632, 7
    %v634 = vsub.s32 %v631, %v633
    %v635 = vrot.slane %v607, %v634
    %v636 = vcombine.high %v614, %v614
    %v637 = vcombine.high %v621, %v621
    %v638 = vcombine.high %v628, %v628
    %v639 = vcombine.high %v635, %v635
    %648 = vst [vmem:[#allocation9] sm:$0x1] %v614
    %649 = vst [vmem:[#allocation9 + $0x8] sm:$0x1] %v628
    %650 = vst [vmem:[#allocation9 + $0x10] sm:$0x1] %v636
    %651 = vst [vmem:[#allocation9 + $0x18] sm:$0x1] %v638
    %652 = vst [vmem:[#allocation9 + $0x20] sm:$0x1] %v621
    %653 = vst [vmem:[#allocation9 + $0x28] sm:$0x1] %v635
    %654 = vst [vmem:[#allocation9 + $0x30] sm:$0x1] %v637
    %655 = vst [vmem:[#allocation9 + $0x38] sm:$0x1] %v639
    %v656 = vld [vmem:[#allocation2 + $0x18] sm:$0xff]
    %v657 = vld [vmem:[#allocation2 + $0x20] sm:$0xff]
    %v658 = vld [vmem:[#allocation2 + $0x28] sm:$0xff]
    %v659 = vpack.c.bf16 %v589, %v589
    %660 = vmatprep.subr.bf16.mxu0 %v461
    %661 = vmatpush1.bf16.msra.mxu0 %v460
    %662 = vmatprep.subr.bf16.mxu0 %v458
    %663 = vmatpush1.bf16.msra.mxu0 %v457
    %664 = vmatprep.subr.bf16.mxu0 %v455
    %665 = vmatpush1.bf16.msra.mxu0 %v454
    %666 = vmatprep.subr.bf16.mxu0 %v452
    %667 = vmatpush1.bf16.msra.mxu0 %v451
    %668 = vmatprep.subr.bf16.mxu0 %v449
    %669 = vmatpush1.bf16.msra.mxu0 %v448
    %670 = vmatprep.subr.bf16.mxu0 %v446
    %671 = vmatpush1.bf16.msra.mxu0 %v445
    %672 = vmatprep.subr.bf16.mxu0 %v443
    %673 = vmatpush1.bf16.msra.mxu0 %v442
    %674 = vmatprep.subr.bf16.mxu0 %v440
    %675 = vmatpush1.bf16.msra.mxu0 %v439
    %676 = vmatprep.subr.bf16.mxu0 0
    %677 = vmatpush2.bf16.msra.mxu0 0
    %678 = vmatprep.subr.bf16.mxu0 0
    %679 = vmatpush2.bf16.msra.mxu0 0
    %680 = vmatprep.subr.bf16.mxu0 0
    %681 = vmatpush2.bf16.msra.mxu0 0
    %682 = vmatprep.subr.bf16.mxu0 0
    %683 = vmatpush2.bf16.msra.mxu0 0
    %684 = vmatprep.subr.bf16.mxu0 0
    %685 = vmatpush2.bf16.msra.mxu0 0
    %686 = vmatprep.subr.bf16.mxu0 0
    %687 = vmatpush2.bf16.msra.mxu0 0
    %688 = vmatprep.subr.bf16.mxu0 0
    %689 = vmatpush2.bf16.msra.mxu0 0
    %690 = vmatprep.subr.bf16.mxu0 0
    %691 = vmatpush2.bf16.msra.mxu0 0
    %692 = vmatprep.mubr.bf16.mxu0 0
    %693 = vmatmul.mubr.bf16.gmra.mxu0 %v659
    %v694 = vpop.f32.mrf.mxu0
    %v695 = vadd.f32 0.0, %v694
    %v696 = vpop.f32.mrf.mxu0
    %v697 = vadd.f32 0.0, %v696
    %v698 = vpop.f32.mrf.mxu0
    %v699 = vpop.f32.mrf.mxu0
    %700 = vdwg.mxu0
    %701 = vmatprep.subr.bf16.mxu0 0
    %702 = vmatpush1.bf16.msra.mxu0 %v462
    %703 = vmatprep.subr.bf16.mxu0 0
    %704 = vmatpush1.bf16.msra.mxu0 %v459
    %705 = vmatprep.subr.bf16.mxu0 0
    %706 = vmatpush1.bf16.msra.mxu0 %v456
    %707 = vmatprep.subr.bf16.mxu0 0
    %708 = vmatpush1.bf16.msra.mxu0 %v453
    %709 = vmatprep.subr.bf16.mxu0 0
    %710 = vmatpush1.bf16.msra.mxu0 %v450
    %711 = vmatprep.subr.bf16.mxu0 0
    %712 = vmatpush1.bf16.msra.mxu0 %v447
    %713 = vmatprep.subr.bf16.mxu0 0
    %714 = vmatpush1.bf16.msra.mxu0 %v444
    %715 = vmatprep.subr.bf16.mxu0 0
    %716 = vmatpush1.bf16.msra.mxu0 %v441
    %717 = vmatprep.subr.bf16.mxu0 0
    %718 = vmatpush2.bf16.msra.mxu0 0
    %719 = vmatprep.subr.bf16.mxu0 0
    %720 = vmatpush2.bf16.msra.mxu0 0
    %721 = vmatprep.subr.bf16.mxu0 0
    %722 = vmatpush2.bf16.msra.mxu0 0
    %723 = vmatprep.subr.bf16.mxu0 0
    %724 = vmatpush2.bf16.msra.mxu0 0
    %725 = vmatprep.subr.bf16.mxu0 0
    %726 = vmatpush2.bf16.msra.mxu0 0
    %727 = vmatprep.subr.bf16.mxu0 0
    %728 = vmatpush2.bf16.msra.mxu0 0
    %729 = vmatprep.subr.bf16.mxu0 0
    %730 = vmatpush2.bf16.msra.mxu0 0
    %731 = vmatprep.subr.bf16.mxu0 0
    %732 = vmatpush2.bf16.msra.mxu0 0
    %733 = vmatprep.mubr.bf16.mxu0 0
    %734 = vmatmul.mubr.bf16.gmra.mxu0 %v659
    %v735 = vpop.f32.mrf.mxu0
    %v736 = vadd.f32 0.0, %v735
    %v737 = vpop.f32.mrf.mxu0
    %v738 = vpop.f32.mrf.mxu0
    %v739 = vpop.f32.mrf.mxu0
    %740 = vdwg.mxu0
    %v741 = vadd.f32 %v656, %v695
    %v742 = vxor.u32 %v741, 2147483648
    %v743 = vmul.f32 %v742, 1.442695
    %v744 = vpow.pop %v743
    %v745 = vadd.f32 %v744, 1.0
    %v746 = vrcp.pop %v745
    %v747 = vmul.f32 1.0, %v746
    %v748 = vadd.f32 %v657, %v697
    %v749 = vxor.u32 %v748, 2147483648
    %v750 = vmul.f32 %v749, 1.442695
    %v751 = vpow.pop %v750
    %v752 = vadd.f32 %v751, 1.0
    %v753 = vrcp.pop %v752
    %v754 = vmul.f32 1.0, %v753
    %v755 = vadd.f32 %v736, %v352
    %v756 = vmul.f32 %v747, %v755
    %v757 = vadd.f32 %v658, %v756
    %v758 = vtanh.pop %v757
    %v759 = vsub.f32 1.0, %v754
    %v760 = vmul.f32 %v759, %v758
    %v761 = vmul.f32 %v754, %v589
    %v762 = vadd.f32 %v760, %v761
    %v764 = vcombine.high %v762, %v762
    %v766 = vunpack.c.l.s4 1966171168
    %v767 = vunpack.c.0.s8 %v766
    %v768 = vlaneseq
    %v769 = vshrl.u32 %v768, 7
    %v770 = vsub.s32 %v767, %v769
    %v771 = vrot.slane %v762, %v770
    %v773 = vunpack.c.l.s4 1966171168
    %v774 = vunpack.c.0.s8 %v773
    %v775 = vlaneseq
    %v776 = vshrl.u32 %v775, 7
    %v777 = vsub.s32 %v774, %v776
    %v778 = vrot.slane %v764, %v777
    %v779 = vcombine.high %v771, %v771
    %v780 = vcombine.high %v778, %v778
    %v782 = vunpack.c.l.s4 1966171168
    %v783 = vunpack.c.0.s8 %v782
    %v784 = vlaneseq
    %v785 = vshrl.u32 %v784, 7
    %v786 = vsub.s32 %v783, %v785
    %v787 = vrot.slane %v771, %v786
    %v789 = vunpack.c.l.s4 1966171168
    %v790 = vunpack.c.0.s8 %v789
    %v791 = vlaneseq
    %v792 = vshrl.u32 %v791, 7
    %v793 = vsub.s32 %v790, %v792
    %v794 = vrot.slane %v778, %v793
    %v796 = vunpack.c.l.s4 1966171168
    %v797 = vunpack.c.0.s8 %v796
    %v798 = vlaneseq
    %v799 = vshrl.u32 %v798, 7
    %v800 = vsub.s32 %v797, %v799
    %v801 = vrot.slane %v779, %v800
    %v803 = vunpack.c.l.s4 1966171168
    %v804 = vunpack.c.0.s8 %v803
    %v805 = vlaneseq
    %v806 = vshrl.u32 %v805, 7
    %v807 = vsub.s32 %v804, %v806
    %v808 = vrot.slane %v780, %v807
    %v809 = vcombine.high %v787, %v787
    %v810 = vcombine.high %v794, %v794
    %v811 = vcombine.high %v801, %v801
    %v812 = vcombine.high %v808, %v808
    %821 = vst [vmem:[#allocation9 + $0x1] sm:$0x1] %v787
    %822 = vst [vmem:[#allocation9 + $0x9] sm:$0x1] %v801
    %823 = vst [vmem:[#allocation9 + $0x11] sm:$0x1] %v809
    %824 = vst [vmem:[#allocation9 + $0x19] sm:$0x1] %v811
    %825 = vst [vmem:[#allocation9 + $0x21] sm:$0x1] %v794
    %826 = vst [vmem:[#allocation9 + $0x29] sm:$0x1] %v808
    %827 = vst [vmem:[#allocation9 + $0x31] sm:$0x1] %v810
    %828 = vst [vmem:[#allocation9 + $0x39] sm:$0x1] %v812
    %v829 = vld [vmem:[#allocation2 + $0x30] sm:$0xff]
    %v830 = vld [vmem:[#allocation2 + $0x38] sm:$0xff]
    %v831 = vld [vmem:[#allocation2 + $0x40] sm:$0xff]
    %v832 = vpack.c.bf16 %v762, %v762
    %833 = vmatprep.subr.bf16.mxu0 %v461
    %834 = vmatpush1.bf16.msra.mxu0 %v460
    %835 = vmatprep.subr.bf16.mxu0 %v458
    %836 = vmatpush1.bf16.msra.mxu0 %v457
    %837 = vmatprep.subr.bf16.mxu0 %v455
    %838 = vmatpush1.bf16.msra.mxu0 %v454
    %839 = vmatprep.subr.bf16.mxu0 %v452
    %840 = vmatpush1.bf16.msra.mxu0 %v451
    %841 = vmatprep.subr.bf16.mxu0 %v449
    %842 = vmatpush1.bf16.msra.mxu0 %v448
    %843 = vmatprep.subr.bf16.mxu0 %v446
    %844 = vmatpush1.bf16.msra.mxu0 %v445
    %845 = vmatprep.subr.bf16.mxu0 %v443
    %846 = vmatpush1.bf16.msra.mxu0 %v442
    %847 = vmatprep.subr.bf16.mxu0 %v440
    %848 = vmatpush1.bf16.msra.mxu0 %v439
    %849 = vmatprep.subr.bf16.mxu0 0
    %850 = vmatpush2.bf16.msra.mxu0 0
    %851 = vmatprep.subr.bf16.mxu0 0
    %852 = vmatpush2.bf16.msra.mxu0 0
    %853 = vmatprep.subr.bf16.mxu0 0
    %854 = vmatpush2.bf16.msra.mxu0 0
    %855 = vmatprep.subr.bf16.mxu0 0
    %856 = vmatpush2.bf16.msra.mxu0 0
    %857 = vmatprep.subr.bf16.mxu0 0
    %858 = vmatpush2.bf16.msra.mxu0 0
    %859 = vmatprep.subr.bf16.mxu0 0
    %860 = vmatpush2.bf16.msra.mxu0 0
    %861 = vmatprep.subr.bf16.mxu0 0
    %862 = vmatpush2.bf16.msra.mxu0 0
    %863 = vmatprep.subr.bf16.mxu0 0
    %864 = vmatpush2.bf16.msra.mxu0 0
    %865 = vmatprep.mubr.bf16.mxu0 0
    %866 = vmatmul.mubr.bf16.gmra.mxu0 %v832
    %v867 = vpop.f32.mrf.mxu0
    %v868 = vadd.f32 0.0, %v867
    %v869 = vpop.f32.mrf.mxu0
    %v870 = vadd.f32 0.0, %v869
    %v871 = vpop.f32.mrf.mxu0
    %v872 = vpop.f32.mrf.mxu0
    %873 = vdwg.mxu0
    %874 = vmatprep.subr.bf16.mxu0 0
    %875 = vmatpush1.bf16.msra.mxu0 %v462
    %876 = vmatprep.subr.bf16.mxu0 0
    %877 = vmatpush1.bf16.msra.mxu0 %v459
    %878 = vmatprep.subr.bf16.mxu0 0
    %879 = vmatpush1.bf16.msra.mxu0 %v456
    %880 = vmatprep.subr.bf16.mxu0 0
    %881 = vmatpush1.bf16.msra.mxu0 %v453
    %882 = vmatprep.subr.bf16.mxu0 0
    %883 = vmatpush1.bf16.msra.mxu0 %v450
    %884 = vmatprep.subr.bf16.mxu0 0
    %885 = vmatpush1.bf16.msra.mxu0 %v447
    %886 = vmatprep.subr.bf16.mxu0 0
    %887 = vmatpush1.bf16.msra.mxu0 %v444
    %888 = vmatprep.subr.bf16.mxu0 0
    %889 = vmatpush1.bf16.msra.mxu0 %v441
    %890 = vmatprep.subr.bf16.mxu0 0
    %891 = vmatpush2.bf16.msra.mxu0 0
    %892 = vmatprep.subr.bf16.mxu0 0
    %893 = vmatpush2.bf16.msra.mxu0 0
    %894 = vmatprep.subr.bf16.mxu0 0
    %895 = vmatpush2.bf16.msra.mxu0 0
    %896 = vmatprep.subr.bf16.mxu0 0
    %897 = vmatpush2.bf16.msra.mxu0 0
    %898 = vmatprep.subr.bf16.mxu0 0
    %899 = vmatpush2.bf16.msra.mxu0 0
    %900 = vmatprep.subr.bf16.mxu0 0
    %901 = vmatpush2.bf16.msra.mxu0 0
    %902 = vmatprep.subr.bf16.mxu0 0
    %903 = vmatpush2.bf16.msra.mxu0 0
    %904 = vmatprep.subr.bf16.mxu0 0
    %905 = vmatpush2.bf16.msra.mxu0 0
    %906 = vmatprep.mubr.bf16.mxu0 0
    %907 = vmatmul.mubr.bf16.gmra.mxu0 %v832
    %v908 = vpop.f32.mrf.mxu0
    %v909 = vadd.f32 0.0, %v908
    %v910 = vpop.f32.mrf.mxu0
    %v911 = vpop.f32.mrf.mxu0
    %v912 = vpop.f32.mrf.mxu0
    %913 = vdwg.mxu0
    %v914 = vadd.f32 %v829, %v868
    %v915 = vxor.u32 %v914, 2147483648
    %v916 = vmul.f32 %v915, 1.442695
    %v917 = vpow.pop %v916
    %v918 = vadd.f32 %v917, 1.0
    %v919 = vrcp.pop %v918
    %v920 = vmul.f32 1.0, %v919
    %v921 = vadd.f32 %v830, %v870
    %v922 = vxor.u32 %v921, 2147483648
    %v923 = vmul.f32 %v922, 1.442695
    %v924 = vpow.pop %v923
    %v925 = vadd.f32 %v924, 1.0
    %v926 = vrcp.pop %v925
    %v927 = vmul.f32 1.0, %v926
    %v928 = vadd.f32 %v909, %v352
    %v929 = vmul.f32 %v920, %v928
    %v930 = vadd.f32 %v831, %v929
    %v931 = vtanh.pop %v930
    %v932 = vsub.f32 1.0, %v927
    %v933 = vmul.f32 %v932, %v931
    %v934 = vmul.f32 %v927, %v762
    %v935 = vadd.f32 %v933, %v934
    %v937 = vcombine.high %v935, %v935
    %v939 = vunpack.c.l.s4 1966171168
    %v940 = vunpack.c.0.s8 %v939
    %v941 = vlaneseq
    %v942 = vshrl.u32 %v941, 7
    %v943 = vsub.s32 %v940, %v942
    %v944 = vrot.slane %v935, %v943
    %v946 = vunpack.c.l.s4 1966171168
    %v947 = vunpack.c.0.s8 %v946
    %v948 = vlaneseq
    %v949 = vshrl.u32 %v948, 7
    %v950 = vsub.s32 %v947, %v949
    %v951 = vrot.slane %v937, %v950
    %v952 = vcombine.high %v944, %v944
    %v953 = vcombine.high %v951, %v951
    %v955 = vunpack.c.l.s4 1966171168
    %v956 = vunpack.c.0.s8 %v955
    %v957 = vlaneseq
    %v958 = vshrl.u32 %v957, 7
    %v959 = vsub.s32 %v956, %v958
    %v960 = vrot.slane %v944, %v959
    %v962 = vunpack.c.l.s4 1966171168
    %v963 = vunpack.c.0.s8 %v962
    %v964 = vlaneseq
    %v965 = vshrl.u32 %v964, 7
    %v966 = vsub.s32 %v963, %v965
    %v967 = vrot.slane %v951, %v966
    %v969 = vunpack.c.l.s4 1966171168
    %v970 = vunpack.c.0.s8 %v969
    %v971 = vlaneseq
    %v972 = vshrl.u32 %v971, 7
    %v973 = vsub.s32 %v970, %v972
    %v974 = vrot.slane %v952, %v973
    %v976 = vunpack.c.l.s4 1966171168
    %v977 = vunpack.c.0.s8 %v976
    %v978 = vlaneseq
    %v979 = vshrl.u32 %v978, 7
    %v980 = vsub.s32 %v977, %v979
    %v981 = vrot.slane %v953, %v980
    %v982 = vcombine.high %v960, %v960
    %v983 = vcombine.high %v967, %v967
    %v984 = vcombine.high %v974, %v974
    %v985 = vcombine.high %v981, %v981
    %994 = vst [vmem:[#allocation9 + $0x2] sm:$0x1] %v960
    %995 = vst [vmem:[#allocation9 + $0xa] sm:$0x1] %v974
    %996 = vst [vmem:[#allocation9 + $0x12] sm:$0x1] %v982
    %997 = vst [vmem:[#allocation9 + $0x1a] sm:$0x1] %v984
    %998 = vst [vmem:[#allocation9 + $0x22] sm:$0x1] %v967
    %999 = vst [vmem:[#allocation9 + $0x2a] sm:$0x1] %v981
    %1000 = vst [vmem:[#allocation9 + $0x32] sm:$0x1] %v983
    %1001 = vst [vmem:[#allocation9 + $0x3a] sm:$0x1] %v985
    %v1002 = vld [vmem:[#allocation2 + $0x48] sm:$0xff]
    %v1003 = vld [vmem:[#allocation2 + $0x50] sm:$0xff]
    %v1004 = vld [vmem:[#allocation2 + $0x58] sm:$0xff]
    %v1005 = vpack.c.bf16 %v935, %v935
    %1006 = vmatprep.subr.bf16.mxu0 %v461
    %1007 = vmatpush1.bf16.msra.mxu0 %v460
    %1008 = vmatprep.subr.bf16.mxu0 %v458
    %1009 = vmatpush1.bf16.msra.mxu0 %v457
    %1010 = vmatprep.subr.bf16.mxu0 %v455
    %1011 = vmatpush1.bf16.msra.mxu0 %v454
    %1012 = vmatprep.subr.bf16.mxu0 %v452
    %1013 = vmatpush1.bf16.msra.mxu0 %v451
    %1014 = vmatprep.subr.bf16.mxu0 %v449
    %1015 = vmatpush1.bf16.msra.mxu0 %v448
    %1016 = vmatprep.subr.bf16.mxu0 %v446
    %1017 = vmatpush1.bf16.msra.mxu0 %v445
    %1018 = vmatprep.subr.bf16.mxu0 %v443
    %1019 = vmatpush1.bf16.msra.mxu0 %v442
    %1020 = vmatprep.subr.bf16.mxu0 %v440
    %1021 = vmatpush1.bf16.msra.mxu0 %v439
    %1022 = vmatprep.subr.bf16.mxu0 0
    %1023 = vmatpush2.bf16.msra.mxu0 0
    %1024 = vmatprep.subr.bf16.mxu0 0
    %1025 = vmatpush2.bf16.msra.mxu0 0
    %1026 = vmatprep.subr.bf16.mxu0 0
    %1027 = vmatpush2.bf16.msra.mxu0 0
    %1028 = vmatprep.subr.bf16.mxu0 0
    %1029 = vmatpush2.bf16.msra.mxu0 0
    %1030 = vmatprep.subr.bf16.mxu0 0
    %1031 = vmatpush2.bf16.msra.mxu0 0
    %1032 = vmatprep.subr.bf16.mxu0 0
    %1033 = vmatpush2.bf16.msra.mxu0 0
    %1034 = vmatprep.subr.bf16.mxu0 0
    %1035 = vmatpush2.bf16.msra.mxu0 0
    %1036 = vmatprep.subr.bf16.mxu0 0
    %1037 = vmatpush2.bf16.msra.mxu0 0
    %1038 = vmatprep.mubr.bf16.mxu0 0
    %1039 = vmatmul.mubr.bf16.gmra.mxu0 %v1005
    %v1040 = vpop.f32.mrf.mxu0
    %v1041 = vadd.f32 0.0, %v1040
    %v1042 = vpop.f32.mrf.mxu0
    %v1043 = vadd.f32 0.0, %v1042
    %v1044 = vpop.f32.mrf.mxu0
    %v1045 = vpop.f32.mrf.mxu0
    %1046 = vdwg.mxu0
    %1047 = vmatprep.subr.bf16.mxu0 0
    %1048 = vmatpush1.bf16.msra.mxu0 %v462
    %1049 = vmatprep.subr.bf16.mxu0 0
    %1050 = vmatpush1.bf16.msra.mxu0 %v459
    %1051 = vmatprep.subr.bf16.mxu0 0
    %1052 = vmatpush1.bf16.msra.mxu0 %v456
    %1053 = vmatprep.subr.bf16.mxu0 0
    %1054 = vmatpush1.bf16.msra.mxu0 %v453
    %1055 = vmatprep.subr.bf16.mxu0 0
    %1056 = vmatpush1.bf16.msra.mxu0 %v450
    %1057 = vmatprep.subr.bf16.mxu0 0
    %1058 = vmatpush1.bf16.msra.mxu0 %v447
    %1059 = vmatprep.subr.bf16.mxu0 0
    %1060 = vmatpush1.bf16.msra.mxu0 %v444
    %1061 = vmatprep.subr.bf16.mxu0 0
    %1062 = vmatpush1.bf16.msra.mxu0 %v441
    %1063 = vmatprep.subr.bf16.mxu0 0
    %1064 = vmatpush2.bf16.msra.mxu0 0
    %1065 = vmatprep.subr.bf16.mxu0 0
    %1066 = vmatpush2.bf16.msra.mxu0 0
    %1067 = vmatprep.subr.bf16.mxu0 0
    %1068 = vmatpush2.bf16.msra.mxu0 0
    %1069 = vmatprep.subr.bf16.mxu0 0
    %1070 = vmatpush2.bf16.msra.mxu0 0
    %1071 = vmatprep.subr.bf16.mxu0 0
    %1072 = vmatpush2.bf16.msra.mxu0 0
    %1073 = vmatprep.subr.bf16.mxu0 0
    %1074 = vmatpush2.bf16.msra.mxu0 0
    %1075 = vmatprep.subr.bf16.mxu0 0
    %1076 = vmatpush2.bf16.msra.mxu0 0
    %1077 = vmatprep.subr.bf16.mxu0 0
    %1078 = vmatpush2.bf16.msra.mxu0 0
    %1079 = vmatprep.mubr.bf16.mxu0 0
    %1080 = vmatmul.mubr.bf16.gmra.mxu0 %v1005
    %v1081 = vpop.f32.mrf.mxu0
    %v1082 = vadd.f32 0.0, %v1081
    %v1083 = vpop.f32.mrf.mxu0
    %v1084 = vpop.f32.mrf.mxu0
    %v1085 = vpop.f32.mrf.mxu0
    %1086 = vdwg.mxu0
    %v1087 = vadd.f32 %v1002, %v1041
    %v1088 = vxor.u32 %v1087, 2147483648
    %v1089 = vmul.f32 %v1088, 1.442695
    %v1090 = vpow.pop %v1089
    %v1091 = vadd.f32 %v1090, 1.0
    %v1092 = vrcp.pop %v1091
    %v1093 = vmul.f32 1.0, %v1092
    %v1094 = vadd.f32 %v1003, %v1043
    %v1095 = vxor.u32 %v1094, 2147483648
    %v1096 = vmul.f32 %v1095, 1.442695
    %v1097 = vpow.pop %v1096
    %v1098 = vadd.f32 %v1097, 1.0
    %v1099 = vrcp.pop %v1098
    %v1100 = vmul.f32 1.0, %v1099
    %v1101 = vadd.f32 %v1082, %v352
    %v1102 = vmul.f32 %v1093, %v1101
    %v1103 = vadd.f32 %v1004, %v1102
    %v1104 = vtanh.pop %v1103
    %v1105 = vsub.f32 1.0, %v1100
    %v1106 = vmul.f32 %v1105, %v1104
    %v1107 = vmul.f32 %v1100, %v935
    %v1108 = vadd.f32 %v1106, %v1107
    %v1110 = vcombine.high %v1108, %v1108
    %v1112 = vunpack.c.l.s4 1966171168
    %v1113 = vunpack.c.0.s8 %v1112
    %v1114 = vlaneseq
    %v1115 = vshrl.u32 %v1114, 7
    %v1116 = vsub.s32 %v1113, %v1115
    %v1117 = vrot.slane %v1108, %v1116
    %v1119 = vunpack.c.l.s4 1966171168
    %v1120 = vunpack.c.0.s8 %v1119
    %v1121 = vlaneseq
    %v1122 = vshrl.u32 %v1121, 7
    %v1123 = vsub.s32 %v1120, %v1122
    %v1124 = vrot.slane %v1110, %v1123
    %v1125 = vcombine.high %v1117, %v1117
    %v1126 = vcombine.high %v1124, %v1124
    %v1128 = vunpack.c.l.s4 1966171168
    %v1129 = vunpack.c.0.s8 %v1128
    %v1130 = vlaneseq
    %v1131 = vshrl.u32 %v1130, 7
    %v1132 = vsub.s32 %v1129, %v1131
    %v1133 = vrot.slane %v1117, %v1132
    %v1135 = vunpack.c.l.s4 1966171168
    %v1136 = vunpack.c.0.s8 %v1135
    %v1137 = vlaneseq
    %v1138 = vshrl.u32 %v1137, 7
    %v1139 = vsub.s32 %v1136, %v1138
    %v1140 = vrot.slane %v1124, %v1139
    %v1142 = vunpack.c.l.s4 1966171168
    %v1143 = vunpack.c.0.s8 %v1142
    %v1144 = vlaneseq
    %v1145 = vshrl.u32 %v1144, 7
    %v1146 = vsub.s32 %v1143, %v1145
    %v1147 = vrot.slane %v1125, %v1146
    %v1149 = vunpack.c.l.s4 1966171168
    %v1150 = vunpack.c.0.s8 %v1149
    %v1151 = vlaneseq
    %v1152 = vshrl.u32 %v1151, 7
    %v1153 = vsub.s32 %v1150, %v1152
    %v1154 = vrot.slane %v1126, %v1153
    %v1155 = vcombine.high %v1133, %v1133
    %v1156 = vcombine.high %v1140, %v1140
    %v1157 = vcombine.high %v1147, %v1147
    %v1158 = vcombine.high %v1154, %v1154
    %1167 = vst [vmem:[#allocation9 + $0x3] sm:$0x1] %v1133
    %1168 = vst [vmem:[#allocation9 + $0xb] sm:$0x1] %v1147
    %1169 = vst [vmem:[#allocation9 + $0x13] sm:$0x1] %v1155
    %1170 = vst [vmem:[#allocation9 + $0x1b] sm:$0x1] %v1157
    %1171 = vst [vmem:[#allocation9 + $0x23] sm:$0x1] %v1140
    %1172 = vst [vmem:[#allocation9 + $0x2b] sm:$0x1] %v1154
    %1173 = vst [vmem:[#allocation9 + $0x33] sm:$0x1] %v1156
    %1174 = vst [vmem:[#allocation9 + $0x3b] sm:$0x1] %v1158
    %v1175 = vld [vmem:[#allocation2 + $0x60] sm:$0xff]
    %v1176 = vld [vmem:[#allocation2 + $0x68] sm:$0xff]
    %v1177 = vld [vmem:[#allocation2 + $0x70] sm:$0xff]
    %v1178 = vpack.c.bf16 %v1108, %v1108
    %1179 = vmatprep.subr.bf16.mxu0 %v461
    %1180 = vmatpush1.bf16.msra.mxu0 %v460
    %1181 = vmatprep.subr.bf16.mxu0 %v458
    %1182 = vmatpush1.bf16.msra.mxu0 %v457
    %1183 = vmatprep.subr.bf16.mxu0 %v455
    %1184 = vmatpush1.bf16.msra.mxu0 %v454
    %1185 = vmatprep.subr.bf16.mxu0 %v452
    %1186 = vmatpush1.bf16.msra.mxu0 %v451
    %1187 = vmatprep.subr.bf16.mxu0 %v449
    %1188 = vmatpush1.bf16.msra.mxu0 %v448
    %1189 = vmatprep.subr.bf16.mxu0 %v446
    %1190 = vmatpush1.bf16.msra.mxu0 %v445
    %1191 = vmatprep.subr.bf16.mxu0 %v443
    %1192 = vmatpush1.bf16.msra.mxu0 %v442
    %1193 = vmatprep.subr.bf16.mxu0 %v440
    %1194 = vmatpush1.bf16.msra.mxu0 %v439
    %1195 = vmatprep.subr.bf16.mxu0 0
    %1196 = vmatpush2.bf16.msra.mxu0 0
    %1197 = vmatprep.subr.bf16.mxu0 0
    %1198 = vmatpush2.bf16.msra.mxu0 0
    %1199 = vmatprep.subr.bf16.mxu0 0
    %1200 = vmatpush2.bf16.msra.mxu0 0
    %1201 = vmatprep.subr.bf16.mxu0 0
    %1202 = vmatpush2.bf16.msra.mxu0 0
    %1203 = vmatprep.subr.bf16.mxu0 0
    %1204 = vmatpush2.bf16.msra.mxu0 0
    %1205 = vmatprep.subr.bf16.mxu0 0
    %1206 = vmatpush2.bf16.msra.mxu0 0
    %1207 = vmatprep.subr.bf16.mxu0 0
    %1208 = vmatpush2.bf16.msra.mxu0 0
    %1209 = vmatprep.subr.bf16.mxu0 0
    %1210 = vmatpush2.bf16.msra.mxu0 0
    %1211 = vmatprep.mubr.bf16.mxu0 0
    %1212 = vmatmul.mubr.bf16.gmra.mxu0 %v1178
    %v1213 = vpop.f32.mrf.mxu0
    %v1214 = vadd.f32 0.0, %v1213
    %v1215 = vpop.f32.mrf.mxu0
    %v1216 = vadd.f32 0.0, %v1215
    %v1217 = vpop.f32.mrf.mxu0
    %v1218 = vpop.f32.mrf.mxu0
    %1219 = vdwg.mxu0
    %1220 = vmatprep.subr.bf16.mxu0 0
    %1221 = vmatpush1.bf16.msra.mxu0 %v462
    %1222 = vmatprep.subr.bf16.mxu0 0
    %1223 = vmatpush1.bf16.msra.mxu0 %v459
    %1224 = vmatprep.subr.bf16.mxu0 0
    %1225 = vmatpush1.bf16.msra.mxu0 %v456
    %1226 = vmatprep.subr.bf16.mxu0 0
    %1227 = vmatpush1.bf16.msra.mxu0 %v453
    %1228 = vmatprep.subr.bf16.mxu0 0
    %1229 = vmatpush1.bf16.msra.mxu0 %v450
    %1230 = vmatprep.subr.bf16.mxu0 0
    %1231 = vmatpush1.bf16.msra.mxu0 %v447
    %1232 = vmatprep.subr.bf16.mxu0 0
    %1233 = vmatpush1.bf16.msra.mxu0 %v444
    %1234 = vmatprep.subr.bf16.mxu0 0
    %1235 = vmatpush1.bf16.msra.mxu0 %v441
    %1236 = vmatprep.subr.bf16.mxu0 0
    %1237 = vmatpush2.bf16.msra.mxu0 0
    %1238 = vmatprep.subr.bf16.mxu0 0
    %1239 = vmatpush2.bf16.msra.mxu0 0
    %1240 = vmatprep.subr.bf16.mxu0 0
    %1241 = vmatpush2.bf16.msra.mxu0 0
    %1242 = vmatprep.subr.bf16.mxu0 0
    %1243 = vmatpush2.bf16.msra.mxu0 0
    %1244 = vmatprep.subr.bf16.mxu0 0
    %1245 = vmatpush2.bf16.msra.mxu0 0
    %1246 = vmatprep.subr.bf16.mxu0 0
    %1247 = vmatpush2.bf16.msra.mxu0 0
    %1248 = vmatprep.subr.bf16.mxu0 0
    %1249 = vmatpush2.bf16.msra.mxu0 0
    %1250 = vmatprep.subr.bf16.mxu0 0
    %1251 = vmatpush2.bf16.msra.mxu0 0
    %1252 = vmatprep.mubr.bf16.mxu0 0
    %1253 = vmatmul.mubr.bf16.gmra.mxu0 %v1178
    %v1254 = vpop.f32.mrf.mxu0
    %v1255 = vadd.f32 0.0, %v1254
    %v1256 = vpop.f32.mrf.mxu0
    %v1257 = vpop.f32.mrf.mxu0
    %v1258 = vpop.f32.mrf.mxu0
    %1259 = vdwg.mxu0
    %v1260 = vadd.f32 %v1175, %v1214
    %v1261 = vxor.u32 %v1260, 2147483648
    %v1262 = vmul.f32 %v1261, 1.442695
    %v1263 = vpow.pop %v1262
    %v1264 = vadd.f32 %v1263, 1.0
    %v1265 = vrcp.pop %v1264
    %v1266 = vmul.f32 1.0, %v1265
    %v1267 = vadd.f32 %v1176, %v1216
    %v1268 = vxor.u32 %v1267, 2147483648
    %v1269 = vmul.f32 %v1268, 1.442695
    %v1270 = vpow.pop %v1269
    %v1271 = vadd.f32 %v1270, 1.0
    %v1272 = vrcp.pop %v1271
    %v1273 = vmul.f32 1.0, %v1272
    %v1274 = vadd.f32 %v1255, %v352
    %v1275 = vmul.f32 %v1266, %v1274
    %v1276 = vadd.f32 %v1177, %v1275
    %v1277 = vtanh.pop %v1276
    %v1278 = vsub.f32 1.0, %v1273
    %v1279 = vmul.f32 %v1278, %v1277
    %v1280 = vmul.f32 %v1273, %v1108
    %v1281 = vadd.f32 %v1279, %v1280
    %v1283 = vcombine.high %v1281, %v1281
    %v1285 = vunpack.c.l.s4 1966171168
    %v1286 = vunpack.c.0.s8 %v1285
    %v1287 = vlaneseq
    %v1288 = vshrl.u32 %v1287, 7
    %v1289 = vsub.s32 %v1286, %v1288
    %v1290 = vrot.slane %v1281, %v1289
    %v1292 = vunpack.c.l.s4 1966171168
    %v1293 = vunpack.c.0.s8 %v1292
    %v1294 = vlaneseq
    %v1295 = vshrl.u32 %v1294, 7
    %v1296 = vsub.s32 %v1293, %v1295
    %v1297 = vrot.slane %v1283, %v1296
    %v1298 = vcombine.high %v1290, %v1290
    %v1299 = vcombine.high %v1297, %v1297
    %v1301 = vunpack.c.l.s4 1966171168
    %v1302 = vunpack.c.0.s8 %v1301
    %v1303 = vlaneseq
    %v1304 = vshrl.u32 %v1303, 7
    %v1305 = vsub.s32 %v1302, %v1304
    %v1306 = vrot.slane %v1290, %v1305
    %v1308 = vunpack.c.l.s4 1966171168
    %v1309 = vunpack.c.0.s8 %v1308
    %v1310 = vlaneseq
    %v1311 = vshrl.u32 %v1310, 7
    %v1312 = vsub.s32 %v1309, %v1311
    %v1313 = vrot.slane %v1297, %v1312
    %v1315 = vunpack.c.l.s4 1966171168
    %v1316 = vunpack.c.0.s8 %v1315
    %v1317 = vlaneseq
    %v1318 = vshrl.u32 %v1317, 7
    %v1319 = vsub.s32 %v1316, %v1318
    %v1320 = vrot.slane %v1298, %v1319
    %v1322 = vunpack.c.l.s4 1966171168
    %v1323 = vunpack.c.0.s8 %v1322
    %v1324 = vlaneseq
    %v1325 = vshrl.u32 %v1324, 7
    %v1326 = vsub.s32 %v1323, %v1325
    %v1327 = vrot.slane %v1299, %v1326
    %v1328 = vcombine.high %v1306, %v1306
    %v1329 = vcombine.high %v1313, %v1313
    %v1330 = vcombine.high %v1320, %v1320
    %v1331 = vcombine.high %v1327, %v1327
    %1340 = vst [vmem:[#allocation9 + $0x4] sm:$0x1] %v1306
    %1341 = vst [vmem:[#allocation9 + $0xc] sm:$0x1] %v1320
    %1342 = vst [vmem:[#allocation9 + $0x14] sm:$0x1] %v1328
    %1343 = vst [vmem:[#allocation9 + $0x1c] sm:$0x1] %v1330
    %1344 = vst [vmem:[#allocation9 + $0x24] sm:$0x1] %v1313
    %1345 = vst [vmem:[#allocation9 + $0x2c] sm:$0x1] %v1327
    %1346 = vst [vmem:[#allocation9 + $0x34] sm:$0x1] %v1329
    %1347 = vst [vmem:[#allocation9 + $0x3c] sm:$0x1] %v1331
    %v1348 = vld [vmem:[#allocation2 + $0x78] sm:$0xff]
    %v1349 = vld [vmem:[#allocation2 + $0x80] sm:$0xff]
    %v1350 = vld [vmem:[#allocation2 + $0x88] sm:$0xff]
    %v1351 = vpack.c.bf16 %v1281, %v1281
    %1352 = vmatprep.subr.bf16.mxu0 %v461
    %1353 = vmatpush1.bf16.msra.mxu0 %v460
    %1354 = vmatprep.subr.bf16.mxu0 %v458
    %1355 = vmatpush1.bf16.msra.mxu0 %v457
    %1356 = vmatprep.subr.bf16.mxu0 %v455
    %1357 = vmatpush1.bf16.msra.mxu0 %v454
    %1358 = vmatprep.subr.bf16.mxu0 %v452
    %1359 = vmatpush1.bf16.msra.mxu0 %v451
    %1360 = vmatprep.subr.bf16.mxu0 %v449
    %1361 = vmatpush1.bf16.msra.mxu0 %v448
    %1362 = vmatprep.subr.bf16.mxu0 %v446
    %1363 = vmatpush1.bf16.msra.mxu0 %v445
    %1364 = vmatprep.subr.bf16.mxu0 %v443
    %1365 = vmatpush1.bf16.msra.mxu0 %v442
    %1366 = vmatprep.subr.bf16.mxu0 %v440
    %1367 = vmatpush1.bf16.msra.mxu0 %v439
    %1368 = vmatprep.subr.bf16.mxu0 0
    %1369 = vmatpush2.bf16.msra.mxu0 0
    %1370 = vmatprep.subr.bf16.mxu0 0
    %1371 = vmatpush2.bf16.msra.mxu0 0
    %1372 = vmatprep.subr.bf16.mxu0 0
    %1373 = vmatpush2.bf16.msra.mxu0 0
    %1374 = vmatprep.subr.bf16.mxu0 0
    %1375 = vmatpush2.bf16.msra.mxu0 0
    %1376 = vmatprep.subr.bf16.mxu0 0
    %1377 = vmatpush2.bf16.msra.mxu0 0
    %1378 = vmatprep.subr.bf16.mxu0 0
    %1379 = vmatpush2.bf16.msra.mxu0 0
    %1380 = vmatprep.subr.bf16.mxu0 0
    %1381 = vmatpush2.bf16.msra.mxu0 0
    %1382 = vmatprep.subr.bf16.mxu0 0
    %1383 = vmatpush2.bf16.msra.mxu0 0
    %1384 = vmatprep.mubr.bf16.mxu0 0
    %1385 = vmatmul.mubr.bf16.gmra.mxu0 %v1351
    %v1386 = vpop.f32.mrf.mxu0
    %v1387 = vadd.f32 0.0, %v1386
    %v1388 = vpop.f32.mrf.mxu0
    %v1389 = vadd.f32 0.0, %v1388
    %v1390 = vpop.f32.mrf.mxu0
    %v1391 = vpop.f32.mrf.mxu0
    %1392 = vdwg.mxu0
    %1393 = vmatprep.subr.bf16.mxu0 0
    %1394 = vmatpush1.bf16.msra.mxu0 %v462
    %1395 = vmatprep.subr.bf16.mxu0 0
    %1396 = vmatpush1.bf16.msra.mxu0 %v459
    %1397 = vmatprep.subr.bf16.mxu0 0
    %1398 = vmatpush1.bf16.msra.mxu0 %v456
    %1399 = vmatprep.subr.bf16.mxu0 0
    %1400 = vmatpush1.bf16.msra.mxu0 %v453
    %1401 = vmatprep.subr.bf16.mxu0 0
    %1402 = vmatpush1.bf16.msra.mxu0 %v450
    %1403 = vmatprep.subr.bf16.mxu0 0
    %1404 = vmatpush1.bf16.msra.mxu0 %v447
    %1405 = vmatprep.subr.bf16.mxu0 0
    %1406 = vmatpush1.bf16.msra.mxu0 %v444
    %1407 = vmatprep.subr.bf16.mxu0 0
    %1408 = vmatpush1.bf16.msra.mxu0 %v441
    %1409 = vmatprep.subr.bf16.mxu0 0
    %1410 = vmatpush2.bf16.msra.mxu0 0
    %1411 = vmatprep.subr.bf16.mxu0 0
    %1412 = vmatpush2.bf16.msra.mxu0 0
    %1413 = vmatprep.subr.bf16.mxu0 0
    %1414 = vmatpush2.bf16.msra.mxu0 0
    %1415 = vmatprep.subr.bf16.mxu0 0
    %1416 = vmatpush2.bf16.msra.mxu0 0
    %1417 = vmatprep.subr.bf16.mxu0 0
    %1418 = vmatpush2.bf16.msra.mxu0 0
    %1419 = vmatprep.subr.bf16.mxu0 0
    %1420 = vmatpush2.bf16.msra.mxu0 0
    %1421 = vmatprep.subr.bf16.mxu0 0
    %1422 = vmatpush2.bf16.msra.mxu0 0
    %1423 = vmatprep.subr.bf16.mxu0 0
    %1424 = vmatpush2.bf16.msra.mxu0 0
    %1425 = vmatprep.mubr.bf16.mxu0 0
    %1426 = vmatmul.mubr.bf16.gmra.mxu0 %v1351
    %v1427 = vpop.f32.mrf.mxu0
    %v1428 = vadd.f32 0.0, %v1427
    %v1429 = vpop.f32.mrf.mxu0
    %v1430 = vpop.f32.mrf.mxu0
    %v1431 = vpop.f32.mrf.mxu0
    %1432 = vdwg.mxu0
    %v1433 = vadd.f32 %v1348, %v1387
    %v1434 = vxor.u32 %v1433, 2147483648
    %v1435 = vmul.f32 %v1434, 1.442695
    %v1436 = vpow.pop %v1435
    %v1437 = vadd.f32 %v1436, 1.0
    %v1438 = vrcp.pop %v1437
    %v1439 = vmul.f32 1.0, %v1438
    %v1440 = vadd.f32 %v1349, %v1389
    %v1441 = vxor.u32 %v1440, 2147483648
    %v1442 = vmul.f32 %v1441, 1.442695
    %v1443 = vpow.pop %v1442
    %v1444 = vadd.f32 %v1443, 1.0
    %v1445 = vrcp.pop %v1444
    %v1446 = vmul.f32 1.0, %v1445
    %v1447 = vadd.f32 %v1428, %v352
    %v1448 = vmul.f32 %v1439, %v1447
    %v1449 = vadd.f32 %v1350, %v1448
    %v1450 = vtanh.pop %v1449
    %v1451 = vsub.f32 1.0, %v1446
    %v1452 = vmul.f32 %v1451, %v1450
    %v1453 = vmul.f32 %v1446, %v1281
    %v1454 = vadd.f32 %v1452, %v1453
    %v1456 = vcombine.high %v1454, %v1454
    %v1458 = vunpack.c.l.s4 1966171168
    %v1459 = vunpack.c.0.s8 %v1458
    %v1460 = vlaneseq
    %v1461 = vshrl.u32 %v1460, 7
    %v1462 = vsub.s32 %v1459, %v1461
    %v1463 = vrot.slane %v1454, %v1462
    %v1465 = vunpack.c.l.s4 1966171168
    %v1466 = vunpack.c.0.s8 %v1465
    %v1467 = vlaneseq
    %v1468 = vshrl.u32 %v1467, 7
    %v1469 = vsub.s32 %v1466, %v1468
    %v1470 = vrot.slane %v1456, %v1469
    %v1471 = vcombine.high %v1463, %v1463
    %v1472 = vcombine.high %v1470, %v1470
    %v1474 = vunpack.c.l.s4 1966171168
    %v1475 = vunpack.c.0.s8 %v1474
    %v1476 = vlaneseq
    %v1477 = vshrl.u32 %v1476, 7
    %v1478 = vsub.s32 %v1475, %v1477
    %v1479 = vrot.slane %v1463, %v1478
    %v1481 = vunpack.c.l.s4 1966171168
    %v1482 = vunpack.c.0.s8 %v1481
    %v1483 = vlaneseq
    %v1484 = vshrl.u32 %v1483, 7
    %v1485 = vsub.s32 %v1482, %v1484
    %v1486 = vrot.slane %v1470, %v1485
    %v1488 = vunpack.c.l.s4 1966171168
    %v1489 = vunpack.c.0.s8 %v1488
    %v1490 = vlaneseq
    %v1491 = vshrl.u32 %v1490, 7
    %v1492 = vsub.s32 %v1489, %v1491
    %v1493 = vrot.slane %v1471, %v1492
    %v1495 = vunpack.c.l.s4 1966171168
    %v1496 = vunpack.c.0.s8 %v1495
    %v1497 = vlaneseq
    %v1498 = vshrl.u32 %v1497, 7
    %v1499 = vsub.s32 %v1496, %v1498
    %v1500 = vrot.slane %v1472, %v1499
    %v1501 = vcombine.high %v1479, %v1479
    %v1502 = vcombine.high %v1486, %v1486
    %v1503 = vcombine.high %v1493, %v1493
    %v1504 = vcombine.high %v1500, %v1500
    %1513 = vst [vmem:[#allocation9 + $0x5] sm:$0x1] %v1479
    %1514 = vst [vmem:[#allocation9 + $0xd] sm:$0x1] %v1493
    %1515 = vst [vmem:[#allocation9 + $0x15] sm:$0x1] %v1501
    %1516 = vst [vmem:[#allocation9 + $0x1d] sm:$0x1] %v1503
    %1517 = vst [vmem:[#allocation9 + $0x25] sm:$0x1] %v1486
    %1518 = vst [vmem:[#allocation9 + $0x2d] sm:$0x1] %v1500
    %1519 = vst [vmem:[#allocation9 + $0x35] sm:$0x1] %v1502
    %1520 = vst [vmem:[#allocation9 + $0x3d] sm:$0x1] %v1504
    %v1521 = vld [vmem:[#allocation2 + $0x90] sm:$0xff]
    %v1522 = vld [vmem:[#allocation2 + $0x98] sm:$0xff]
    %v1523 = vld [vmem:[#allocation2 + $0xa0] sm:$0xff]
    %v1524 = vpack.c.bf16 %v1454, %v1454
    %1525 = vmatprep.subr.bf16.mxu0 %v461
    %1526 = vmatpush1.bf16.msra.mxu0 %v460
    %1527 = vmatprep.subr.bf16.mxu0 %v458
    %1528 = vmatpush1.bf16.msra.mxu0 %v457
    %1529 = vmatprep.subr.bf16.mxu0 %v455
    %1530 = vmatpush1.bf16.msra.mxu0 %v454
    %1531 = vmatprep.subr.bf16.mxu0 %v452
    %1532 = vmatpush1.bf16.msra.mxu0 %v451
    %1533 = vmatprep.subr.bf16.mxu0 %v449
    %1534 = vmatpush1.bf16.msra.mxu0 %v448
    %1535 = vmatprep.subr.bf16.mxu0 %v446
    %1536 = vmatpush1.bf16.msra.mxu0 %v445
    %1537 = vmatprep.subr.bf16.mxu0 %v443
    %1538 = vmatpush1.bf16.msra.mxu0 %v442
    %1539 = vmatprep.subr.bf16.mxu0 %v440
    %1540 = vmatpush1.bf16.msra.mxu0 %v439
    %1541 = vmatprep.subr.bf16.mxu0 0
    %1542 = vmatpush2.bf16.msra.mxu0 0
    %1543 = vmatprep.subr.bf16.mxu0 0
    %1544 = vmatpush2.bf16.msra.mxu0 0
    %1545 = vmatprep.subr.bf16.mxu0 0
    %1546 = vmatpush2.bf16.msra.mxu0 0
    %1547 = vmatprep.subr.bf16.mxu0 0
    %1548 = vmatpush2.bf16.msra.mxu0 0
    %1549 = vmatprep.subr.bf16.mxu0 0
    %1550 = vmatpush2.bf16.msra.mxu0 0
    %1551 = vmatprep.subr.bf16.mxu0 0
    %1552 = vmatpush2.bf16.msra.mxu0 0
    %1553 = vmatprep.subr.bf16.mxu0 0
    %1554 = vmatpush2.bf16.msra.mxu0 0
    %1555 = vmatprep.subr.bf16.mxu0 0
    %1556 = vmatpush2.bf16.msra.mxu0 0
    %1557 = vmatprep.mubr.bf16.mxu0 0
    %1558 = vmatmul.mubr.bf16.gmra.mxu0 %v1524
    %v1559 = vpop.f32.mrf.mxu0
    %v1560 = vadd.f32 0.0, %v1559
    %v1561 = vpop.f32.mrf.mxu0
    %v1562 = vadd.f32 0.0, %v1561
    %v1563 = vpop.f32.mrf.mxu0
    %v1564 = vpop.f32.mrf.mxu0
    %1565 = vdwg.mxu0
    %1566 = vmatprep.subr.bf16.mxu0 0
    %1567 = vmatpush1.bf16.msra.mxu0 %v462
    %1568 = vmatprep.subr.bf16.mxu0 0
    %1569 = vmatpush1.bf16.msra.mxu0 %v459
    %1570 = vmatprep.subr.bf16.mxu0 0
    %1571 = vmatpush1.bf16.msra.mxu0 %v456
    %1572 = vmatprep.subr.bf16.mxu0 0
    %1573 = vmatpush1.bf16.msra.mxu0 %v453
    %1574 = vmatprep.subr.bf16.mxu0 0
    %1575 = vmatpush1.bf16.msra.mxu0 %v450
    %1576 = vmatprep.subr.bf16.mxu0 0
    %1577 = vmatpush1.bf16.msra.mxu0 %v447
    %1578 = vmatprep.subr.bf16.mxu0 0
    %1579 = vmatpush1.bf16.msra.mxu0 %v444
    %1580 = vmatprep.subr.bf16.mxu0 0
    %1581 = vmatpush1.bf16.msra.mxu0 %v441
    %1582 = vmatprep.subr.bf16.mxu0 0
    %1583 = vmatpush2.bf16.msra.mxu0 0
    %1584 = vmatprep.subr.bf16.mxu0 0
    %1585 = vmatpush2.bf16.msra.mxu0 0
    %1586 = vmatprep.subr.bf16.mxu0 0
    %1587 = vmatpush2.bf16.msra.mxu0 0
    %1588 = vmatprep.subr.bf16.mxu0 0
    %1589 = vmatpush2.bf16.msra.mxu0 0
    %1590 = vmatprep.subr.bf16.mxu0 0
    %1591 = vmatpush2.bf16.msra.mxu0 0
    %1592 = vmatprep.subr.bf16.mxu0 0
    %1593 = vmatpush2.bf16.msra.mxu0 0
    %1594 = vmatprep.subr.bf16.mxu0 0
    %1595 = vmatpush2.bf16.msra.mxu0 0
    %1596 = vmatprep.subr.bf16.mxu0 0
    %1597 = vmatpush2.bf16.msra.mxu0 0
    %1598 = vmatprep.mubr.bf16.mxu0 0
    %1599 = vmatmul.mubr.bf16.gmra.mxu0 %v1524
    %v1600 = vpop.f32.mrf.mxu0
    %v1601 = vadd.f32 0.0, %v1600
    %v1602 = vpop.f32.mrf.mxu0
    %v1603 = vpop.f32.mrf.mxu0
    %v1604 = vpop.f32.mrf.mxu0
    %1605 = vdwg.mxu0
    %v1606 = vadd.f32 %v1521, %v1560
    %v1607 = vxor.u32 %v1606, 2147483648
    %v1608 = vmul.f32 %v1607, 1.442695
    %v1609 = vpow.pop %v1608
    %v1610 = vadd.f32 %v1609, 1.0
    %v1611 = vrcp.pop %v1610
    %v1612 = vmul.f32 1.0, %v1611
    %v1613 = vadd.f32 %v1522, %v1562
    %v1614 = vxor.u32 %v1613, 2147483648
    %v1615 = vmul.f32 %v1614, 1.442695
    %v1616 = vpow.pop %v1615
    %v1617 = vadd.f32 %v1616, 1.0
    %v1618 = vrcp.pop %v1617
    %v1619 = vmul.f32 1.0, %v1618
    %v1620 = vadd.f32 %v1601, %v352
    %v1621 = vmul.f32 %v1612, %v1620
    %v1622 = vadd.f32 %v1523, %v1621
    %v1623 = vtanh.pop %v1622
    %v1624 = vsub.f32 1.0, %v1619
    %v1625 = vmul.f32 %v1624, %v1623
    %v1626 = vmul.f32 %v1619, %v1454
    %v1627 = vadd.f32 %v1625, %v1626
    %v1629 = vcombine.high %v1627, %v1627
    %v1631 = vunpack.c.l.s4 1966171168
    %v1632 = vunpack.c.0.s8 %v1631
    %v1633 = vlaneseq
    %v1634 = vshrl.u32 %v1633, 7
    %v1635 = vsub.s32 %v1632, %v1634
    %v1636 = vrot.slane %v1627, %v1635
    %v1638 = vunpack.c.l.s4 1966171168
    %v1639 = vunpack.c.0.s8 %v1638
    %v1640 = vlaneseq
    %v1641 = vshrl.u32 %v1640, 7
    %v1642 = vsub.s32 %v1639, %v1641
    %v1643 = vrot.slane %v1629, %v1642
    %v1644 = vcombine.high %v1636, %v1636
    %v1645 = vcombine.high %v1643, %v1643
    %v1647 = vunpack.c.l.s4 1966171168
    %v1648 = vunpack.c.0.s8 %v1647
    %v1649 = vlaneseq
    %v1650 = vshrl.u32 %v1649, 7
    %v1651 = vsub.s32 %v1648, %v1650
    %v1652 = vrot.slane %v1636, %v1651
    %v1654 = vunpack.c.l.s4 1966171168
    %v1655 = vunpack.c.0.s8 %v1654
    %v1656 = vlaneseq
    %v1657 = vshrl.u32 %v1656, 7
    %v1658 = vsub.s32 %v1655, %v1657
    %v1659 = vrot.slane %v1643, %v1658
    %v1661 = vunpack.c.l.s4 1966171168
    %v1662 = vunpack.c.0.s8 %v1661
    %v1663 = vlaneseq
    %v1664 = vshrl.u32 %v1663, 7
    %v1665 = vsub.s32 %v1662, %v1664
    %v1666 = vrot.slane %v1644, %v1665
    %v1668 = vunpack.c.l.s4 1966171168
    %v1669 = vunpack.c.0.s8 %v1668
    %v1670 = vlaneseq
    %v1671 = vshrl.u32 %v1670, 7
    %v1672 = vsub.s32 %v1669, %v1671
    %v1673 = vrot.slane %v1645, %v1672
    %v1674 = vcombine.high %v1652, %v1652
    %v1675 = vcombine.high %v1659, %v1659
    %v1676 = vcombine.high %v1666, %v1666
    %v1677 = vcombine.high %v1673, %v1673
    %1686 = vst [vmem:[#allocation9 + $0x6] sm:$0x1] %v1652
    %1687 = vst [vmem:[#allocation9 + $0xe] sm:$0x1] %v1666
    %1688 = vst [vmem:[#allocation9 + $0x16] sm:$0x1] %v1674
    %1689 = vst [vmem:[#allocation9 + $0x1e] sm:$0x1] %v1676
    %1690 = vst [vmem:[#allocation9 + $0x26] sm:$0x1] %v1659
    %1691 = vst [vmem:[#allocation9 + $0x2e] sm:$0x1] %v1673
    %1692 = vst [vmem:[#allocation9 + $0x36] sm:$0x1] %v1675
    %1693 = vst [vmem:[#allocation9 + $0x3e] sm:$0x1] %v1677
    %v1694 = vld [vmem:[#allocation2 + $0xa8] sm:$0xff]
    %v1695 = vld [vmem:[#allocation2 + $0xb0] sm:$0xff]
    %v1696 = vld [vmem:[#allocation2 + $0xb8] sm:$0xff]
    %v1697 = vpack.c.bf16 %v1627, %v1627
    %1698 = vmatprep.subr.bf16.mxu0 %v461
    %1699 = vmatpush1.bf16.msra.mxu0 %v460
    %1700 = vmatprep.subr.bf16.mxu0 %v458
    %1701 = vmatpush1.bf16.msra.mxu0 %v457
    %1702 = vmatprep.subr.bf16.mxu0 %v455
    %1703 = vmatpush1.bf16.msra.mxu0 %v454
    %1704 = vmatprep.subr.bf16.mxu0 %v452
    %1705 = vmatpush1.bf16.msra.mxu0 %v451
    %1706 = vmatprep.subr.bf16.mxu0 %v449
    %1707 = vmatpush1.bf16.msra.mxu0 %v448
    %1708 = vmatprep.subr.bf16.mxu0 %v446
    %1709 = vmatpush1.bf16.msra.mxu0 %v445
    %1710 = vmatprep.subr.bf16.mxu0 %v443
    %1711 = vmatpush1.bf16.msra.mxu0 %v442
    %1712 = vmatprep.subr.bf16.mxu0 %v440
    %1713 = vmatpush1.bf16.msra.mxu0 %v439
    %1714 = vmatprep.subr.bf16.mxu0 0
    %1715 = vmatpush2.bf16.msra.mxu0 0
    %1716 = vmatprep.subr.bf16.mxu0 0
    %1717 = vmatpush2.bf16.msra.mxu0 0
    %1718 = vmatprep.subr.bf16.mxu0 0
    %1719 = vmatpush2.bf16.msra.mxu0 0
    %1720 = vmatprep.subr.bf16.mxu0 0
    %1721 = vmatpush2.bf16.msra.mxu0 0
    %1722 = vmatprep.subr.bf16.mxu0 0
    %1723 = vmatpush2.bf16.msra.mxu0 0
    %1724 = vmatprep.subr.bf16.mxu0 0
    %1725 = vmatpush2.bf16.msra.mxu0 0
    %1726 = vmatprep.subr.bf16.mxu0 0
    %1727 = vmatpush2.bf16.msra.mxu0 0
    %1728 = vmatprep.subr.bf16.mxu0 0
    %1729 = vmatpush2.bf16.msra.mxu0 0
    %1730 = vmatprep.mubr.bf16.mxu0 0
    %1731 = vmatmul.mubr.bf16.gmra.mxu0 %v1697
    %v1732 = vpop.f32.mrf.mxu0
    %v1733 = vadd.f32 0.0, %v1732
    %v1734 = vpop.f32.mrf.mxu0
    %v1735 = vadd.f32 0.0, %v1734
    %v1736 = vpop.f32.mrf.mxu0
    %v1737 = vpop.f32.mrf.mxu0
    %1738 = vdwg.mxu0
    %1739 = vmatprep.subr.bf16.mxu0 0
    %1740 = vmatpush1.bf16.msra.mxu0 %v462
    %1741 = vmatprep.subr.bf16.mxu0 0
    %1742 = vmatpush1.bf16.msra.mxu0 %v459
    %1743 = vmatprep.subr.bf16.mxu0 0
    %1744 = vmatpush1.bf16.msra.mxu0 %v456
    %1745 = vmatprep.subr.bf16.mxu0 0
    %1746 = vmatpush1.bf16.msra.mxu0 %v453
    %1747 = vmatprep.subr.bf16.mxu0 0
    %1748 = vmatpush1.bf16.msra.mxu0 %v450
    %1749 = vmatprep.subr.bf16.mxu0 0
    %1750 = vmatpush1.bf16.msra.mxu0 %v447
    %1751 = vmatprep.subr.bf16.mxu0 0
    %1752 = vmatpush1.bf16.msra.mxu0 %v444
    %1753 = vmatprep.subr.bf16.mxu0 0
    %1754 = vmatpush1.bf16.msra.mxu0 %v441
    %1755 = vmatprep.subr.bf16.mxu0 0
    %1756 = vmatpush2.bf16.msra.mxu0 0
    %1757 = vmatprep.subr.bf16.mxu0 0
    %1758 = vmatpush2.bf16.msra.mxu0 0
    %1759 = vmatprep.subr.bf16.mxu0 0
    %1760 = vmatpush2.bf16.msra.mxu0 0
    %1761 = vmatprep.subr.bf16.mxu0 0
    %1762 = vmatpush2.bf16.msra.mxu0 0
    %1763 = vmatprep.subr.bf16.mxu0 0
    %1764 = vmatpush2.bf16.msra.mxu0 0
    %1765 = vmatprep.subr.bf16.mxu0 0
    %1766 = vmatpush2.bf16.msra.mxu0 0
    %1767 = vmatprep.subr.bf16.mxu0 0
    %1768 = vmatpush2.bf16.msra.mxu0 0
    %1769 = vmatprep.subr.bf16.mxu0 0
    %1770 = vmatpush2.bf16.msra.mxu0 0
    %1771 = vmatprep.mubr.bf16.mxu0 0
    %1772 = vmatmul.mubr.bf16.gmra.mxu0 %v1697
    %v1773 = vpop.f32.mrf.mxu0
    %v1774 = vadd.f32 0.0, %v1773
    %v1775 = vpop.f32.mrf.mxu0
    %v1776 = vpop.f32.mrf.mxu0
    %v1777 = vpop.f32.mrf.mxu0
    %1778 = vdwg.mxu0
    %v1779 = vadd.f32 %v1694, %v1733
    %v1780 = vxor.u32 %v1779, 2147483648
    %v1781 = vmul.f32 %v1780, 1.442695
    %v1782 = vpow.pop %v1781
    %v1783 = vadd.f32 %v1782, 1.0
    %v1784 = vrcp.pop %v1783
    %v1785 = vmul.f32 1.0, %v1784
    %v1786 = vadd.f32 %v1695, %v1735
    %v1787 = vxor.u32 %v1786, 2147483648
    %v1788 = vmul.f32 %v1787, 1.442695
    %v1789 = vpow.pop %v1788
    %v1790 = vadd.f32 %v1789, 1.0
    %v1791 = vrcp.pop %v1790
    %v1792 = vmul.f32 1.0, %v1791
    %v1793 = vadd.f32 %v1774, %v352
    %v1794 = vmul.f32 %v1785, %v1793
    %v1795 = vadd.f32 %v1696, %v1794
    %v1796 = vtanh.pop %v1795
    %v1797 = vsub.f32 1.0, %v1792
    %v1798 = vmul.f32 %v1797, %v1796
    %v1799 = vmul.f32 %v1792, %v1627
    %v1800 = vadd.f32 %v1798, %v1799
    %v1802 = vcombine.high %v1800, %v1800
    %v1804 = vunpack.c.l.s4 1966171168
    %v1805 = vunpack.c.0.s8 %v1804
    %v1806 = vlaneseq
    %v1807 = vshrl.u32 %v1806, 7
    %v1808 = vsub.s32 %v1805, %v1807
    %v1809 = vrot.slane %v1800, %v1808
    %v1811 = vunpack.c.l.s4 1966171168
    %v1812 = vunpack.c.0.s8 %v1811
    %v1813 = vlaneseq
    %v1814 = vshrl.u32 %v1813, 7
    %v1815 = vsub.s32 %v1812, %v1814
    %v1816 = vrot.slane %v1802, %v1815
    %v1817 = vcombine.high %v1809, %v1809
    %v1818 = vcombine.high %v1816, %v1816
    %v1820 = vunpack.c.l.s4 1966171168
    %v1821 = vunpack.c.0.s8 %v1820
    %v1822 = vlaneseq
    %v1823 = vshrl.u32 %v1822, 7
    %v1824 = vsub.s32 %v1821, %v1823
    %v1825 = vrot.slane %v1809, %v1824
    %v1827 = vunpack.c.l.s4 1966171168
    %v1828 = vunpack.c.0.s8 %v1827
    %v1829 = vlaneseq
    %v1830 = vshrl.u32 %v1829, 7
    %v1831 = vsub.s32 %v1828, %v1830
    %v1832 = vrot.slane %v1816, %v1831
    %v1834 = vunpack.c.l.s4 1966171168
    %v1835 = vunpack.c.0.s8 %v1834
    %v1836 = vlaneseq
    %v1837 = vshrl.u32 %v1836, 7
    %v1838 = vsub.s32 %v1835, %v1837
    %v1839 = vrot.slane %v1817, %v1838
    %v1841 = vunpack.c.l.s4 1966171168
    %v1842 = vunpack.c.0.s8 %v1841
    %v1843 = vlaneseq
    %v1844 = vshrl.u32 %v1843, 7
    %v1845 = vsub.s32 %v1842, %v1844
    %v1846 = vrot.slane %v1818, %v1845
    %v1847 = vcombine.high %v1825, %v1825
    %v1848 = vcombine.high %v1832, %v1832
    %v1849 = vcombine.high %v1839, %v1839
    %v1850 = vcombine.high %v1846, %v1846
    %1859 = vst [vmem:[#allocation9 + $0x7] sm:$0x1] %v1825
    %1860 = vst [vmem:[#allocation9 + $0xf] sm:$0x1] %v1839
    %1861 = vst [vmem:[#allocation9 + $0x17] sm:$0x1] %v1847
    %1862 = vst [vmem:[#allocation9 + $0x1f] sm:$0x1] %v1849
    %1863 = vst [vmem:[#allocation9 + $0x27] sm:$0x1] %v1832
    %1864 = vst [vmem:[#allocation9 + $0x2f] sm:$0x1] %v1846
    %1865 = vst [vmem:[#allocation9 + $0x37] sm:$0x1] %v1848
    %1866 = vst [vmem:[#allocation9 + $0x3f] sm:$0x1] %v1850
    %1867 = vst [vmem:[#allocation10] sm:$0xff] %v1800
    // Predicated region
    $region38: #{tpu_custom_call.1} parent=1 // pred_check
      _
    $region39: #{tpu_custom_call.1} parent=1 // pred_check_branch
      %1869 = sbr.rel (0) target = $region41
    $region40: #{tpu_custom_call.1} parent=1 // pred_region
      %s1871 = ssub.s32 1024, 1024
      %1872 = vsyncadd [#allocation5], %s1871
      %s1873 = sshll.u32 [#allocation9], 4
      %s1874 = int_to_ptr.vmem [resolvable:$true] %s1873
      %1879 = dma.vmem_to_hbm [thread:$0]  %s1874, 1024, %s5, [#allocation5], 128, 128, 8
    $region41: #{tpu_custom_call.1} parent=1 // pred_fallthru
      _
    // Predicated region
    $region42: #{tpu_custom_call.1} parent=1 // pred_check
      _
    $region43: #{tpu_custom_call.1} parent=1 // pred_check_branch
      %1881 = sbr.rel (0) target = $region45
    $region44: #{tpu_custom_call.1} parent=1 // pred_region
      %s1883 = ssub.s32 128, 128
      %1884 = vsyncadd [#allocation11], %s1883
      %s1886 = sshll.u32 [#allocation10], 4
      %s1887 = int_to_ptr.vmem [resolvable:$true] %s1886
      %1889 = dma.vmem_to_hbm [thread:$0]  %s1887, 128, %s6, [#allocation11]
    $region45: #{tpu_custom_call.1} parent=1 // pred_fallthru
      _
    // Predicated region
    $region46: #{tpu_custom_call.1} parent=1 // pred_check
      _
    $region47: #{tpu_custom_call.1} parent=1 // pred_check_branch
      %1891 = sbr.rel (0) target = $region49
    $region48: #{tpu_custom_call.1} parent=1 // pred_region
      %1892 = dma.done [#allocation5], 1024
    $region49: #{tpu_custom_call.1} parent=1 // pred_fallthru
      _
    // Predicated region
    $region50: #{tpu_custom_call.1} parent=1 // pred_check
      _
    $region51: #{tpu_custom_call.1} parent=1 // pred_check_branch
      %1894 = sbr.rel (0) target = $region53
    $region52: #{tpu_custom_call.1} parent=1 // pred_region
      %1895 = dma.done [#allocation11], 128
    $region53: #{tpu_custom_call.1} parent=1 // pred_fallthru
      _
    %1896 = vsyncpa [#allocation4], 1
    %1897 = vsyncpa [#allocation7], 1
    %1898 = vsyncpa [#allocation5], 1
    %1899 = vsyncpa [#allocation11], 1

</llo_original>
